<compile_context>
chip_gen: v7x
topology: tpu7x:2x2x1
jax: 0.10.0
libtpu: 0.0.40
codegen_flags: <defaults>
</compile_context>

<pallas_src>
import functools

import jax
import jax.numpy as jnp
from jax.experimental import pallas as pl
from jax.experimental.pallas import tpu as pltpu


# ---------------------------------------------------------------------------
# In-kernel tap generation in lane-dense (C, H*W) layout (reflect padding).
# ---------------------------------------------------------------------------
def _make_taps(x_chw, H, W, p):
    """Return the (2p+1)**2 conv taps of a reflect-padded KxK window.

    x_chw: (C, H*W) value, spatial flattened row-major (idx = y*W + x).
    Tap (dy, dx) at flat position y*W+x equals x[reflect(y+dy-p), reflect(x+dx-p)]
    (PyTorch 'reflect' padding).  y shifts use whole-row lane concatenation;
    x shifts use pltpu.roll plus per-boundary-column selects, so nothing ever
    leaves the lane-dense (C, HW) layout.
    """
    C, HW = x_chw.shape[0], H * W
    # reflect-extend in y: rows p..1 on top, rows H-2..H-1-p at the bottom
    top = [x_chw[:, i * W:(i + 1) * W] for i in range(p, 0, -1)]
    bot = [x_chw[:, (H - 1 - i) * W:(H - i) * W] for i in range(1, p + 1)]
    xe = jnp.concatenate(top + [x_chw] + bot, axis=1)            # (C, (H+2p)*W)
    col = jax.lax.broadcasted_iota(jnp.int32, (C, HW), 1) % W
    taps = []
    for dy in range(2 * p + 1):
        base = xe[:, dy * W: dy * W + HW]                        # row y+dy-p (reflected)
        rolls = {k: (base if k == 0
                     else pltpu.roll(base, shift=(-k) % HW, axis=1))
                 for k in range(-p, p + 1)}                      # value at column x+k
        for s in range(-p, p + 1):                               # dx = s + p
            t = rolls[s]
            for xc in range(0, -s):                              # left reflect fix (s < 0)
                t = jnp.where(col == xc, rolls[-2 * xc - s], t)
            for xc in range(W - s, W):                           # right reflect fix (s > 0)
                t = jnp.where(col == xc, rolls[2 * (W - 1 - xc) - s], t)
            taps.append(t)
    return taps                                                  # order (dy, dx)


# ---------------------------------------------------------------------------
# Fused Pallas kernel: one batch element per grid step, everything in VMEM.
# ---------------------------------------------------------------------------
def _decoder_block_kernel(x_ref, wada_ref, ab_ref, *rest,
                          H, W, sk, n_dec, final_block, upsample, eps):
    patch_ref = rest[-1]                       # reused VMEM scratch (max_rows, HW) f32
    o_ref = rest[-2]
    up_ref = rest[-3] if upsample else None
    dec_refs = rest[:-3] if upsample else rest[:-2]

    C = x_ref.shape[1]
    x = x_ref[0]                               # (C, HW) f32, channel-major, lane-dense

    # ---- instance norm (per channel over spatial, biased var, no affine) ----
    mean = jnp.mean(x, axis=1, keepdims=True)
    var = jnp.mean(jnp.square(x - mean), axis=1, keepdims=True)
    x = (x - mean) * jax.lax.rsqrt(var + eps)

    # ---- AdaConv: grouped spatial conv + grouped 1x1 conv, pre-folded in the
    #      wrapper into ONE block-diagonal (C, sk*sk*C) weight -> one matmul ----
    p_ada = (sk - 1) // 2
    rows = sk * sk * C
    for t, tap in enumerate(_make_taps(x, H, W, p_ada)):
        patch_ref[t * C:(t + 1) * C, :] = tap
    # TODO(synk): generate/assemble taps in bf16 once misaligned packed sublane
    # stores are verified on the target toolchain; at these sizes the f32->bf16
    # cast of the assembled patch matrix is negligible.
    z = jax.lax.dot_general(
        wada_ref[0], patch_ref[:rows, :].astype(jnp.bfloat16),
        (((1,), (0,)), ((), ())), preferred_element_type=jnp.float32)
    x = z + ab_ref[0]                          # (C, HW) + per-sample (C, 1) bias

    # ---- decoder 3x3 reflect convs: activations never leave VMEM ----
    for i in range(n_dec):
        w_i = dec_refs[2 * i][0]               # (cout, 9*cin) bf16
        b_i = dec_refs[2 * i + 1][0]           # (cout, 1) f32
        cin = x.shape[0]
        for t, tap in enumerate(_make_taps(x, H, W, 1)):
            patch_ref[t * cin:(t + 1) * cin, :] = tap
        y = jax.lax.dot_general(
            w_i, patch_ref[:9 * cin, :].astype(jnp.bfloat16),
            (((1,), (0,)), ((), ())), preferred_element_type=jnp.float32)
        y = y + b_i
        if i != n_dec - 1:
            x = jnp.maximum(y, 0.0)
        else:
            y = jax.nn.sigmoid(y) if final_block else jnp.maximum(y, 0.0)
            if upsample:
                # fused nearest x2 upsample: exact one-hot f32 matmul keeps the
                # kernel's single HBM store lane-dense at (Cout, 4*H*W).
                y = jnp.dot(y, up_ref[...], preferred_element_type=jnp.float32)
            o_ref[0] = y.astype(o_ref.dtype)


# ---------------------------------------------------------------------------
# Parameters
# ---------------------------------------------------------------------------
def init_decoder_block_params(key, style_dim, style_kernel, in_channels,
                              out_channels, groups, convs):
    ks = jax.random.split(key, 3 + convs)

    def w_init(k, shape, fan_in):
        return jax.random.normal(k, shape, jnp.float32) / jnp.sqrt(fan_in)

    cpg = in_channels // groups
    c_dw = in_channels * cpg
    p = {
        # KernelPredictor (PyTorch-style OIHW / OI weights)
        "kp_spatial_w": w_init(ks[0], (c_dw, style_dim, style_kernel, style_kernel),
                               style_dim * style_kernel * style_kernel),
        "kp_spatial_b": jnp.zeros((c_dw,), jnp.float32),
        "kp_pw_w": w_init(ks[1], (c_dw, style_dim), style_dim),
        "kp_pw_b": jnp.zeros((c_dw,), jnp.float32),
        "kp_bias_w": w_init(ks[2], (in_channels, style_dim), style_dim),
        "kp_bias_b": jnp.zeros((in_channels,), jnp.float32),
        # decoder 3x3 convs
        "dec_w": [],
        "dec_b": [],
    }
    cin = in_channels
    for i in range(convs):
        cout = out_channels if i == convs - 1 else in_channels
        p["dec_w"].append(w_init(ks[3 + i], (cout, cin, 3, 3), cin * 9))
        p["dec_b"].append(0.01 * jnp.ones((cout,), jnp.float32))
        cin = cout
    return p


# ---------------------------------------------------------------------------
# Forward
# ---------------------------------------------------------------------------
def decoder_block_forward(params, x_nchw, w_nchw, *, style_kernel, in_channels,
                          out_channels, groups, convs, final_block=False,
                          eps=1e-5):
    assert convs >= 1 and in_channels % groups == 0
    B, C, H, W = x_nchw.shape
    assert C == in_channels
    sk = style_kernel
    cpg = in_channels // groups
    p = (sk - 1) // 2
    HW = H * W

    # -------- KernelPredictor: tiny, plain jnp einsums (per review) --------
    s = w_nchw.astype(jnp.float32)                                 # (B, S, sk, sk)
    S = s.shape[1]
    sp = jnp.pad(s, ((0, 0), (0, 0), (p, p), (p, p)), mode="reflect")
    sp_patches = jnp.stack([sp[:, :, dy:dy + sk, dx:dx + sk]
                            for dy in range(sk) for dx in range(sk)],
                           axis=1)                                 # (B, sk*sk, S, sk, sk)
    w_sp = params["kp_spatial_w"].reshape(in_channels * cpg, S, sk * sk)
    dw = (jnp.einsum("bksyx,csk->bcyx", sp_patches, w_sp)
          + params["kp_spatial_b"][None, :, None, None])           # (B, C*cpg, sk, sk)
    dw = dw.reshape(B, in_channels, cpg, sk, sk)

    pooled = jnp.mean(s, axis=(2, 3))                              # (B, S)
    pw = (pooled @ params["kp_pw_w"].T
          + params["kp_pw_b"]).reshape(B, in_channels, cpg)        # (B, C, cpg)
    ada_bias = pooled @ params["kp_bias_w"].T + params["kp_bias_b"]  # (B, C)

    # -------- fold pointwise into spatial (f32) + block-diagonal expansion ----
    dw_g = dw.reshape(B, groups, cpg, cpg, sk, sk)                 # [b,g,m,i,y,x]
    pw_g = pw.reshape(B, groups, cpg, cpg)                         # [b,g,o,m]
    comb = jnp.einsum("bgom,bgmiyx->bgoiyx", pw_g, dw_g)           # combined group conv
    eye = jnp.eye(groups, dtype=comb.dtype)
    full = jnp.einsum("bgoiyx,gh->bgohiyx", comb, eye)             # block-diag over groups
    full = full.reshape(B, in_channels, in_channels, sk, sk)       # [b, co, ci, y, x]
    # kernel patch rows are ordered (dy, dx, ci) -> weight columns likewise
    w_ada = jnp.transpose(full, (0, 1, 3, 4, 2)).reshape(
        B, in_channels, sk * sk * in_channels).astype(jnp.bfloat16)
    ab = ada_bias.reshape(B, in_channels, 1).astype(jnp.float32)

    # channel-major activations: free reshape of NCHW, no wrapper transpose
    x_flat = x_nchw.reshape(B, in_channels, HW).astype(jnp.float32)

    dec_ops, dec_specs = [], []
    cin = in_channels
    for i in range(convs):
        cout = out_channels if i == convs - 1 else in_channels
        wd, bd = params["dec_w"][i], params["dec_b"][i]            # OIHW, (cout,)
        wmat = jnp.transpose(wd, (0, 2, 3, 1)).reshape(
            1, cout, 9 * cin).astype(jnp.bfloat16)                 # (cout, (dy,dx,ci))
        bmat = bd.reshape(1, cout, 1).astype(jnp.float32)
        dec_ops += [wmat, bmat]
        dec_specs += [pl.BlockSpec(wmat.shape, lambda b: (0, 0, 0)),
                      pl.BlockSpec(bmat.shape, lambda b: (0, 0, 0))]
        cin = cout

    upsample = not final_block
    out_hw = 4 * HW if upsample else HW
    extra_ops, extra_specs = [], []
    if upsample:
        # exact one-hot nearest-x2 expansion matrix U: out[c, j] = y[c, src[j]]
        j = jnp.arange(4 * HW)
        src = (j // (4 * W)) * W + (j % (2 * W)) // 2
        U = (src[None, :] == jnp.arange(HW)[:, None]).astype(jnp.float32)
        extra_ops.append(U)
        extra_specs.append(pl.BlockSpec((HW, 4 * HW), lambda b: (0, 0)))

    max_rows = max(sk * sk, 9) * in_channels

    kernel = functools.partial(
        _decoder_block_kernel, H=H, W=W, sk=sk, n_dec=convs,
        final_block=final_block, upsample=upsample, eps=eps)

    # TODO(synk): for production shapes add a second "parallel" grid axis
    # (row bands / Cout tiles) so both v7x TensorCores are used when B is small.
    y = pl.pallas_call(
        kernel,
        out_shape=jax.ShapeDtypeStruct((B, out_channels, out_hw), jnp.float32),
        grid=(B,),
        in_specs=[
            pl.BlockSpec((1, in_channels, HW), lambda b: (b, 0, 0)),
            pl.BlockSpec((1, in_channels, sk * sk * in_channels),
                         lambda b: (b, 0, 0)),
            pl.BlockSpec((1, in_channels, 1), lambda b: (b, 0, 0)),
        ] + dec_specs + extra_specs,
        out_specs=pl.BlockSpec((1, out_channels, out_hw), lambda b: (b, 0, 0)),
        scratch_shapes=[pltpu.VMEM((max_rows, HW), jnp.float32)],
        compiler_params=pltpu.CompilerParams(
            dimension_semantics=("parallel",),
            vmem_limit_bytes=32 * 1024 * 1024),
    )(x_flat, w_ada, ab, *dec_ops, *extra_ops)

    if upsample:
        return y.reshape(B, out_channels, 2 * H, 2 * W)            # free reshape
    return y.reshape(B, out_channels, H, W)


# ---------------------------------------------------------------------------
if __name__ == "__main__":
    style_dim, style_kernel = 16, 3
    in_channels, out_channels, groups, convs = 8, 4, 2, 2
    final_block = False
    B, H, W = 2, 16, 16

    key = jax.random.PRNGKey(0)
    kx, kw, kp = jax.random.split(key, 3)
    x = jax.random.normal(kx, (B, in_channels, H, W), jnp.float32)
    w = jax.random.normal(kw, (B, style_dim, style_kernel, style_kernel),
                          jnp.float32)
    params = init_decoder_block_params(kp, style_dim, style_kernel, in_channels,
                                       out_channels, groups, convs)

    fwd = jax.jit(functools.partial(
        decoder_block_forward, style_kernel=style_kernel,
        in_channels=in_channels, out_channels=out_channels, groups=groups,
        convs=convs, final_block=final_block))

    y = fwd(params, x, w)
    jax.block_until_ready(y)
    assert y.shape == (B, out_channels, 2 * H, 2 * W), y.shape
    assert bool(jnp.all(jnp.isfinite(y)))
    print("KERNEL_OK")
</pallas_src>

<mosaic_0001>
module attributes {stable_mosaic.version = 11 : i64} {
  func.func @_decoder_block_kernel(%arg0: i32, %arg1: memref<1x8x256xf32, #tpu.memory_space<vmem>>, %arg2: memref<1x8x72xbf16, #tpu.memory_space<vmem>>, %arg3: memref<1x8x1xf32, #tpu.memory_space<vmem>>, %arg4: memref<1x8x72xbf16, #tpu.memory_space<vmem>>, %arg5: memref<1x8x1xf32, #tpu.memory_space<vmem>>, %arg6: memref<1x4x72xbf16, #tpu.memory_space<vmem>>, %arg7: memref<1x4x1xf32, #tpu.memory_space<vmem>>, %arg8: memref<256x1024xf32, #tpu.memory_space<vmem>>, %arg9: memref<1x4x1024xf32, #tpu.memory_space<vmem>>, %arg10: memref<72x256xf32, #tpu.memory_space<vmem>>) attributes {dimension_semantics = [#tpu.dimension_semantics<parallel>], iteration_bounds = array<i64: 2>, scalar_prefetch = 0 : i64, scratch_operands = 1 : i64, tpu.core_type = #tpu.core_type<tc>, window_params = [{transform_indices = @transform_0, window_bounds = array<i64: 1, 8, 256>}, {transform_indices = @transform_1, window_bounds = array<i64: 1, 8, 72>}, {transform_indices = @transform_2, window_bounds = array<i64: 1, 8, 1>}, {pipeline_mode = #tpu.pipeline_mode<synchronous>, transform_indices = @transform_3, window_bounds = array<i64: 1, 8, 72>}, {pipeline_mode = #tpu.pipeline_mode<synchronous>, transform_indices = @transform_4, window_bounds = array<i64: 1, 8, 1>}, {pipeline_mode = #tpu.pipeline_mode<synchronous>, transform_indices = @transform_5, window_bounds = array<i64: 1, 4, 72>}, {pipeline_mode = #tpu.pipeline_mode<synchronous>, transform_indices = @transform_6, window_bounds = array<i64: 1, 4, 1>}, {pipeline_mode = #tpu.pipeline_mode<synchronous>, transform_indices = @transform_7, window_bounds = array<i64: 256, 1024>}, {transform_indices = @transform_8, window_bounds = array<i64: 1, 4, 1024>}]} {
    %c0 = arith.constant 0 : index
    %c0_0 = arith.constant 0 : index
    %c0_1 = arith.constant 0 : index
    %0 = vector.load %arg1[%c0, %c0_0, %c0_1] : memref<1x8x256xf32, #tpu.memory_space<vmem>>, vector<1x8x256xf32>
    %1 = vector.shape_cast %0 : vector<1x8x256xf32> to vector<8x256xf32>
    %cst = arith.constant dense<0.000000e+00> : vector<8xf32>
    %2 = vector.multi_reduction <add>, %1, %cst [1] : vector<8x256xf32> to vector<8xf32>
    %3 = vector.shape_cast %2 : vector<8xf32> to vector<8x1xf32>
    %cst_2 = arith.constant 2.560000e+02 : f32
    %4 = vector.broadcast %cst_2 : f32 to vector<8x1xf32>
    %5 = arith.divf %3, %4 : vector<8x1xf32>
    %6 = vector.broadcast %5 : vector<8x1xf32> to vector<8x256xf32>
    %7 = arith.subf %1, %6 : vector<8x256xf32>
    %8 = arith.mulf %7, %7 : vector<8x256xf32>
    %cst_3 = arith.constant dense<0.000000e+00> : vector<8xf32>
    %9 = vector.multi_reduction <add>, %8, %cst_3 [1] : vector<8x256xf32> to vector<8xf32>
    %10 = vector.shape_cast %9 : vector<8xf32> to vector<8x1xf32>
    %cst_4 = arith.constant 2.560000e+02 : f32
    %11 = vector.broadcast %cst_4 : f32 to vector<8x1xf32>
    %12 = arith.divf %10, %11 : vector<8x1xf32>
    %13 = vector.broadcast %5 : vector<8x1xf32> to vector<8x256xf32>
    %14 = arith.subf %1, %13 : vector<8x256xf32>
    %cst_5 = arith.constant 9.99999974E-6 : f32
    %15 = vector.broadcast %cst_5 : f32 to vector<8x1xf32>
    %16 = arith.addf %12, %15 : vector<8x1xf32>
    %17 = math.rsqrt %16 : vector<8x1xf32>
    %18 = vector.broadcast %17 : vector<8x1xf32> to vector<8x256xf32>
    %19 = arith.mulf %14, %18 : vector<8x256xf32>
    %20 = vector.extract_strided_slice %19 {offsets = [0, 16], sizes = [8, 16], strides = [1, 1]} : vector<8x256xf32> to vector<8x16xf32>
    %21 = vector.extract_strided_slice %19 {offsets = [0, 224], sizes = [8, 16], strides = [1, 1]} : vector<8x256xf32> to vector<8x16xf32>
    %22 = tpu.concatenate %20, %19, %21 in 1 : vector<8x16xf32>, vector<8x256xf32>, vector<8x16xf32> -> vector<8x288xf32>
    %23 = tpu.iota {dimensions = array<i32: 1>} : vector<8x256xi32>
    %c16_i32 = arith.constant 16 : i32
    %c0_i32 = arith.constant 0 : i32
    %24 = arith.cmpi eq, %c16_i32, %c0_i32 : i32
    %c1_i32 = arith.constant 1 : i32
    %25 = arith.select %24, %c1_i32, %c16_i32 : i32
    %26 = vector.broadcast %25 : i32 to vector<8x256xi32>
    %27 = arith.remsi %23, %26 : vector<8x256xi32>
    %c0_i32_6 = arith.constant 0 : i32
    %28 = vector.broadcast %c0_i32_6 : i32 to vector<8x256xi32>
    %29 = arith.cmpi ne, %27, %28 : vector<8x256xi32>
    %c0_i32_7 = arith.constant 0 : i32
    %30 = vector.broadcast %c0_i32_7 : i32 to vector<8x256xi32>
    %31 = arith.cmpi slt, %27, %30 : vector<8x256xi32>
    %c0_i32_8 = arith.constant 0 : i32
    %32 = arith.cmpi slt, %25, %c0_i32_8 : i32
    %33 = vector.broadcast %32 : i1 to vector<8x256xi1>
    %34 = vector.broadcast %33 : vector<8x256xi1> to vector<8x256xi1>
    %35 = arith.xori %31, %34 : vector<8x256xi1>
    %36 = arith.andi %35, %29 : vector<8x256xi1>
    %37 = vector.broadcast %25 : i32 to vector<8x256xi32>
    %38 = arith.addi %27, %37 : vector<8x256xi32>
    %39 = arith.select %36, %38, %27 : vector<8x256xi1>, vector<8x256xi32>
    %40 = vector.extract_strided_slice %22 {offsets = [0, 0], sizes = [8, 256], strides = [1, 1]} : vector<8x288xf32> to vector<8x256xf32>
    %c1_i32_9 = arith.constant 1 : i32
    %41 = tpu.dynamic_rotate %40 by %c1_i32_9 dim 1 : vector<8x256xf32>, i32 -> vector<8x256xf32>
    %c255_i32 = arith.constant 255 : i32
    %42 = tpu.dynamic_rotate %40 by %c255_i32 dim 1 : vector<8x256xf32>, i32 -> vector<8x256xf32>
    %c0_i32_10 = arith.constant 0 : i32
    %43 = vector.broadcast %c0_i32_10 : i32 to vector<8x256xi32>
    %44 = arith.cmpi eq, %39, %43 : vector<8x256xi32>
    %45 = arith.select %44, %42, %41 : vector<8x256xi1>, vector<8x256xf32>
    %c15_i32 = arith.constant 15 : i32
    %46 = vector.broadcast %c15_i32 : i32 to vector<8x256xi32>
    %47 = arith.cmpi eq, %39, %46 : vector<8x256xi32>
    %48 = arith.select %47, %41, %42 : vector<8x256xi1>, vector<8x256xf32>
    %49 = vector.extract_strided_slice %22 {offsets = [0, 16], sizes = [8, 256], strides = [1, 1]} : vector<8x288xf32> to vector<8x256xf32>
    %c1_i32_11 = arith.constant 1 : i32
    %50 = tpu.dynamic_rotate %49 by %c1_i32_11 dim 1 : vector<8x256xf32>, i32 -> vector<8x256xf32>
    %c255_i32_12 = arith.constant 255 : i32
    %51 = tpu.dynamic_rotate %49 by %c255_i32_12 dim 1 : vector<8x256xf32>, i32 -> vector<8x256xf32>
    %c0_i32_13 = arith.constant 0 : i32
    %52 = vector.broadcast %c0_i32_13 : i32 to vector<8x256xi32>
    %53 = arith.cmpi eq, %39, %52 : vector<8x256xi32>
    %54 = arith.select %53, %51, %50 : vector<8x256xi1>, vector<8x256xf32>
    %c15_i32_14 = arith.constant 15 : i32
    %55 = vector.broadcast %c15_i32_14 : i32 to vector<8x256xi32>
    %56 = arith.cmpi eq, %39, %55 : vector<8x256xi32>
    %57 = arith.select %56, %50, %51 : vector<8x256xi1>, vector<8x256xf32>
    %58 = vector.extract_strided_slice %22 {offsets = [0, 32], sizes = [8, 256], strides = [1, 1]} : vector<8x288xf32> to vector<8x256xf32>
    %c1_i32_15 = arith.constant 1 : i32
    %59 = tpu.dynamic_rotate %58 by %c1_i32_15 dim 1 : vector<8x256xf32>, i32 -> vector<8x256xf32>
    %c255_i32_16 = arith.constant 255 : i32
    %60 = tpu.dynamic_rotate %58 by %c255_i32_16 dim 1 : vector<8x256xf32>, i32 -> vector<8x256xf32>
    %c0_i32_17 = arith.constant 0 : i32
    %61 = vector.broadcast %c0_i32_17 : i32 to vector<8x256xi32>
    %62 = arith.cmpi eq, %39, %61 : vector<8x256xi32>
    %63 = arith.select %62, %60, %59 : vector<8x256xi1>, vector<8x256xf32>
    %c15_i32_18 = arith.constant 15 : i32
    %64 = vector.broadcast %c15_i32_18 : i32 to vector<8x256xi32>
    %65 = arith.cmpi eq, %39, %64 : vector<8x256xi32>
    %66 = arith.select %65, %59, %60 : vector<8x256xi1>, vector<8x256xf32>
    %c0_19 = arith.constant 0 : index
    %c0_20 = arith.constant 0 : index
    %67 = vector.load %arg10[%c0_19, %c0_20] : memref<72x256xf32, #tpu.memory_space<vmem>>, vector<8x256xf32>
    tpu.vector_store %arg10[%c0_19, %c0_20], %45 {strides = array<i32>} : memref<72x256xf32, #tpu.memory_space<vmem>>, vector<8x256xf32>,
    %c8 = arith.constant 8 : index
    %c0_21 = arith.constant 0 : index
    %68 = vector.load %arg10[%c8, %c0_21] : memref<72x256xf32, #tpu.memory_space<vmem>>, vector<8x256xf32>
    tpu.vector_store %arg10[%c8, %c0_21], %40 {strides = array<i32>} : memref<72x256xf32, #tpu.memory_space<vmem>>, vector<8x256xf32>,
    %c16 = arith.constant 16 : index
    %c0_22 = arith.constant 0 : index
    %69 = vector.load %arg10[%c16, %c0_22] : memref<72x256xf32, #tpu.memory_space<vmem>>, vector<8x256xf32>
    tpu.vector_store %arg10[%c16, %c0_22], %48 {strides = array<i32>} : memref<72x256xf32, #tpu.memory_space<vmem>>, vector<8x256xf32>,
    %c24 = arith.constant 24 : index
    %c0_23 = arith.constant 0 : index
    %70 = vector.load %arg10[%c24, %c0_23] : memref<72x256xf32, #tpu.memory_space<vmem>>, vector<8x256xf32>
    tpu.vector_store %arg10[%c24, %c0_23], %54 {strides = array<i32>} : memref<72x256xf32, #tpu.memory_space<vmem>>, vector<8x256xf32>,
    %c32 = arith.constant 32 : index
    %c0_24 = arith.constant 0 : index
    %71 = vector.load %arg10[%c32, %c0_24] : memref<72x256xf32, #tpu.memory_space<vmem>>, vector<8x256xf32>
    tpu.vector_store %arg10[%c32, %c0_24], %49 {strides = array<i32>} : memref<72x256xf32, #tpu.memory_space<vmem>>, vector<8x256xf32>,
    %c40 = arith.constant 40 : index
    %c0_25 = arith.constant 0 : index
    %72 = vector.load %arg10[%c40, %c0_25] : memref<72x256xf32, #tpu.memory_space<vmem>>, vector<8x256xf32>
    tpu.vector_store %arg10[%c40, %c0_25], %57 {strides = array<i32>} : memref<72x256xf32, #tpu.memory_space<vmem>>, vector<8x256xf32>,
    %c48 = arith.constant 48 : index
    %c0_26 = arith.constant 0 : index
    %73 = vector.load %arg10[%c48, %c0_26] : memref<72x256xf32, #tpu.memory_space<vmem>>, vector<8x256xf32>
    tpu.vector_store %arg10[%c48, %c0_26], %63 {strides = array<i32>} : memref<72x256xf32, #tpu.memory_space<vmem>>, vector<8x256xf32>,
    %c56 = arith.constant 56 : index
    %c0_27 = arith.constant 0 : index
    %74 = vector.load %arg10[%c56, %c0_27] : memref<72x256xf32, #tpu.memory_space<vmem>>, vector<8x256xf32>
    tpu.vector_store %arg10[%c56, %c0_27], %58 {strides = array<i32>} : memref<72x256xf32, #tpu.memory_space<vmem>>, vector<8x256xf32>,
    %c64 = arith.constant 64 : index
    %c0_28 = arith.constant 0 : index
    %75 = vector.load %arg10[%c64, %c0_28] : memref<72x256xf32, #tpu.memory_space<vmem>>, vector<8x256xf32>
    tpu.vector_store %arg10[%c64, %c0_28], %66 {strides = array<i32>} : memref<72x256xf32, #tpu.memory_space<vmem>>, vector<8x256xf32>,
    %c0_29 = arith.constant 0 : index
    %c0_30 = arith.constant 0 : index
    %c0_31 = arith.constant 0 : index
    %76 = vector.load %arg2[%c0_29, %c0_30, %c0_31] : memref<1x8x72xbf16, #tpu.memory_space<vmem>>, vector<1x8x72xbf16>
    %77 = vector.shape_cast %76 : vector<1x8x72xbf16> to vector<8x72xbf16>
    %c0_32 = arith.constant 0 : index
    %c0_33 = arith.constant 0 : index
    %78 = vector.load %arg10[%c0_32, %c0_33] : memref<72x256xf32, #tpu.memory_space<vmem>>, vector<72x256xf32>
    %79 = arith.truncf %78 : vector<72x256xf32> to vector<72x256xbf16>
    %cst_34 = arith.constant dense<0.000000e+00> : vector<8x256xf32>
    %80 = tpu.matmul %77, %79, %cst_34 {dimension_numbers = #tpu.dot_dimension_numbers<[1], [0], [0], [1], [0, 0, 1, 1], [], []>} : vector<8x72xbf16>, vector<72x256xbf16>, vector<8x256xf32> -> vector<8x256xf32>
    %c0_35 = arith.constant 0 : index
    %c0_36 = arith.constant 0 : index
    %c0_37 = arith.constant 0 : index
    %81 = vector.load %arg3[%c0_35, %c0_36, %c0_37] : memref<1x8x1xf32, #tpu.memory_space<vmem>>, vector<1x8x1xf32>
    %82 = vector.shape_cast %81 : vector<1x8x1xf32> to vector<8x1xf32>
    %83 = vector.broadcast %82 : vector<8x1xf32> to vector<8x256xf32>
    %84 = arith.addf %80, %83 : vector<8x256xf32>
    %c0_38 = arith.constant 0 : index
    %c0_39 = arith.constant 0 : index
    %c0_40 = arith.constant 0 : index
    %85 = vector.load %arg4[%c0_38, %c0_39, %c0_40] : memref<1x8x72xbf16, #tpu.memory_space<vmem>>, vector<1x8x72xbf16>
    %86 = vector.shape_cast %85 : vector<1x8x72xbf16> to vector<8x72xbf16>
    %c0_41 = arith.constant 0 : index
    %c0_42 = arith.constant 0 : index
    %c0_43 = arith.constant 0 : index
    %87 = vector.load %arg5[%c0_41, %c0_42, %c0_43] : memref<1x8x1xf32, #tpu.memory_space<vmem>>, vector<1x8x1xf32>
    %88 = vector.shape_cast %87 : vector<1x8x1xf32> to vector<8x1xf32>
    %89 = vector.extract_strided_slice %84 {offsets = [0, 16], sizes = [8, 16], strides = [1, 1]} : vector<8x256xf32> to vector<8x16xf32>
    %90 = vector.extract_strided_slice %84 {offsets = [0, 224], sizes = [8, 16], strides = [1, 1]} : vector<8x256xf32> to vector<8x16xf32>
    %91 = tpu.concatenate %89, %84, %90 in 1 : vector<8x16xf32>, vector<8x256xf32>, vector<8x16xf32> -> vector<8x288xf32>
    %92 = tpu.iota {dimensions = array<i32: 1>} : vector<8x256xi32>
    %c16_i32_44 = arith.constant 16 : i32
    %c0_i32_45 = arith.constant 0 : i32
    %93 = arith.cmpi eq, %c16_i32_44, %c0_i32_45 : i32
    %c1_i32_46 = arith.constant 1 : i32
    %94 = arith.select %93, %c1_i32_46, %c16_i32_44 : i32
    %95 = vector.broadcast %94 : i32 to vector<8x256xi32>
    %96 = arith.remsi %92, %95 : vector<8x256xi32>
    %c0_i32_47 = arith.constant 0 : i32
    %97 = vector.broadcast %c0_i32_47 : i32 to vector<8x256xi32>
    %98 = arith.cmpi ne, %96, %97 : vector<8x256xi32>
    %c0_i32_48 = arith.constant 0 : i32
    %99 = vector.broadcast %c0_i32_48 : i32 to vector<8x256xi32>
    %100 = arith.cmpi slt, %96, %99 : vector<8x256xi32>
    %c0_i32_49 = arith.constant 0 : i32
    %101 = arith.cmpi slt, %94, %c0_i32_49 : i32
    %102 = vector.broadcast %101 : i1 to vector<8x256xi1>
    %103 = vector.broadcast %102 : vector<8x256xi1> to vector<8x256xi1>
    %104 = arith.xori %100, %103 : vector<8x256xi1>
    %105 = arith.andi %104, %98 : vector<8x256xi1>
    %106 = vector.broadcast %94 : i32 to vector<8x256xi32>
    %107 = arith.addi %96, %106 : vector<8x256xi32>
    %108 = arith.select %105, %107, %96 : vector<8x256xi1>, vector<8x256xi32>
    %109 = vector.extract_strided_slice %91 {offsets = [0, 0], sizes = [8, 256], strides = [1, 1]} : vector<8x288xf32> to vector<8x256xf32>
    %c1_i32_50 = arith.constant 1 : i32
    %110 = tpu.dynamic_rotate %109 by %c1_i32_50 dim 1 : vector<8x256xf32>, i32 -> vector<8x256xf32>
    %c255_i32_51 = arith.constant 255 : i32
    %111 = tpu.dynamic_rotate %109 by %c255_i32_51 dim 1 : vector<8x256xf32>, i32 -> vector<8x256xf32>
    %c0_i32_52 = arith.constant 0 : i32
    %112 = vector.broadcast %c0_i32_52 : i32 to vector<8x256xi32>
    %113 = arith.cmpi eq, %108, %112 : vector<8x256xi32>
    %114 = arith.select %113, %111, %110 : vector<8x256xi1>, vector<8x256xf32>
    %c15_i32_53 = arith.constant 15 : i32
    %115 = vector.broadcast %c15_i32_53 : i32 to vector<8x256xi32>
    %116 = arith.cmpi eq, %108, %115 : vector<8x256xi32>
    %117 = arith.select %116, %110, %111 : vector<8x256xi1>, vector<8x256xf32>
    %118 = vector.extract_strided_slice %91 {offsets = [0, 16], sizes = [8, 256], strides = [1, 1]} : vector<8x288xf32> to vector<8x256xf32>
    %c1_i32_54 = arith.constant 1 : i32
    %119 = tpu.dynamic_rotate %118 by %c1_i32_54 dim 1 : vector<8x256xf32>, i32 -> vector<8x256xf32>
    %c255_i32_55 = arith.constant 255 : i32
    %120 = tpu.dynamic_rotate %118 by %c255_i32_55 dim 1 : vector<8x256xf32>, i32 -> vector<8x256xf32>
    %c0_i32_56 = arith.constant 0 : i32
    %121 = vector.broadcast %c0_i32_56 : i32 to vector<8x256xi32>
    %122 = arith.cmpi eq, %108, %121 : vector<8x256xi32>
    %123 = arith.select %122, %120, %119 : vector<8x256xi1>, vector<8x256xf32>
    %c15_i32_57 = arith.constant 15 : i32
    %124 = vector.broadcast %c15_i32_57 : i32 to vector<8x256xi32>
    %125 = arith.cmpi eq, %108, %124 : vector<8x256xi32>
    %126 = arith.select %125, %119, %120 : vector<8x256xi1>, vector<8x256xf32>
    %127 = vector.extract_strided_slice %91 {offsets = [0, 32], sizes = [8, 256], strides = [1, 1]} : vector<8x288xf32> to vector<8x256xf32>
    %c1_i32_58 = arith.constant 1 : i32
    %128 = tpu.dynamic_rotate %127 by %c1_i32_58 dim 1 : vector<8x256xf32>, i32 -> vector<8x256xf32>
    %c255_i32_59 = arith.constant 255 : i32
    %129 = tpu.dynamic_rotate %127 by %c255_i32_59 dim 1 : vector<8x256xf32>, i32 -> vector<8x256xf32>
    %c0_i32_60 = arith.constant 0 : i32
    %130 = vector.broadcast %c0_i32_60 : i32 to vector<8x256xi32>
    %131 = arith.cmpi eq, %108, %130 : vector<8x256xi32>
    %132 = arith.select %131, %129, %128 : vector<8x256xi1>, vector<8x256xf32>
    %c15_i32_61 = arith.constant 15 : i32
    %133 = vector.broadcast %c15_i32_61 : i32 to vector<8x256xi32>
    %134 = arith.cmpi eq, %108, %133 : vector<8x256xi32>
    %135 = arith.select %134, %128, %129 : vector<8x256xi1>, vector<8x256xf32>
    %c0_62 = arith.constant 0 : index
    %c0_63 = arith.constant 0 : index
    %136 = vector.load %arg10[%c0_62, %c0_63] : memref<72x256xf32, #tpu.memory_space<vmem>>, vector<8x256xf32>
    tpu.vector_store %arg10[%c0_62, %c0_63], %114 {strides = array<i32>} : memref<72x256xf32, #tpu.memory_space<vmem>>, vector<8x256xf32>,
    %c8_64 = arith.constant 8 : index
    %c0_65 = arith.constant 0 : index
    %137 = vector.load %arg10[%c8_64, %c0_65] : memref<72x256xf32, #tpu.memory_space<vmem>>, vector<8x256xf32>
    tpu.vector_store %arg10[%c8_64, %c0_65], %109 {strides = array<i32>} : memref<72x256xf32, #tpu.memory_space<vmem>>, vector<8x256xf32>,
    %c16_66 = arith.constant 16 : index
    %c0_67 = arith.constant 0 : index
    %138 = vector.load %arg10[%c16_66, %c0_67] : memref<72x256xf32, #tpu.memory_space<vmem>>, vector<8x256xf32>
    tpu.vector_store %arg10[%c16_66, %c0_67], %117 {strides = array<i32>} : memref<72x256xf32, #tpu.memory_space<vmem>>, vector<8x256xf32>,
    %c24_68 = arith.constant 24 : index
    %c0_69 = arith.constant 0 : index
    %139 = vector.load %arg10[%c24_68, %c0_69] : memref<72x256xf32, #tpu.memory_space<vmem>>, vector<8x256xf32>
    tpu.vector_store %arg10[%c24_68, %c0_69], %123 {strides = array<i32>} : memref<72x256xf32, #tpu.memory_space<vmem>>, vector<8x256xf32>,
    %c32_70 = arith.constant 32 : index
    %c0_71 = arith.constant 0 : index
    %140 = vector.load %arg10[%c32_70, %c0_71] : memref<72x256xf32, #tpu.memory_space<vmem>>, vector<8x256xf32>
    tpu.vector_store %arg10[%c32_70, %c0_71], %118 {strides = array<i32>} : memref<72x256xf32, #tpu.memory_space<vmem>>, vector<8x256xf32>,
    %c40_72 = arith.constant 40 : index
    %c0_73 = arith.constant 0 : index
    %141 = vector.load %arg10[%c40_72, %c0_73] : memref<72x256xf32, #tpu.memory_space<vmem>>, vector<8x256xf32>
    tpu.vector_store %arg10[%c40_72, %c0_73], %126 {strides = array<i32>} : memref<72x256xf32, #tpu.memory_space<vmem>>, vector<8x256xf32>,
    %c48_74 = arith.constant 48 : index
    %c0_75 = arith.constant 0 : index
    %142 = vector.load %arg10[%c48_74, %c0_75] : memref<72x256xf32, #tpu.memory_space<vmem>>, vector<8x256xf32>
    tpu.vector_store %arg10[%c48_74, %c0_75], %132 {strides = array<i32>} : memref<72x256xf32, #tpu.memory_space<vmem>>, vector<8x256xf32>,
    %c56_76 = arith.constant 56 : index
    %c0_77 = arith.constant 0 : index
    %143 = vector.load %arg10[%c56_76, %c0_77] : memref<72x256xf32, #tpu.memory_space<vmem>>, vector<8x256xf32>
    tpu.vector_store %arg10[%c56_76, %c0_77], %127 {strides = array<i32>} : memref<72x256xf32, #tpu.memory_space<vmem>>, vector<8x256xf32>,
    %c64_78 = arith.constant 64 : index
    %c0_79 = arith.constant 0 : index
    %144 = vector.load %arg10[%c64_78, %c0_79] : memref<72x256xf32, #tpu.memory_space<vmem>>, vector<8x256xf32>
    tpu.vector_store %arg10[%c64_78, %c0_79], %135 {strides = array<i32>} : memref<72x256xf32, #tpu.memory_space<vmem>>, vector<8x256xf32>,
    %c0_80 = arith.constant 0 : index
    %c0_81 = arith.constant 0 : index
    %145 = vector.load %arg10[%c0_80, %c0_81] : memref<72x256xf32, #tpu.memory_space<vmem>>, vector<72x256xf32>
    %146 = arith.truncf %145 : vector<72x256xf32> to vector<72x256xbf16>
    %cst_82 = arith.constant dense<0.000000e+00> : vector<8x256xf32>
    %147 = tpu.matmul %86, %146, %cst_82 {dimension_numbers = #tpu.dot_dimension_numbers<[1], [0], [0], [1], [0, 0, 1, 1], [], []>} : vector<8x72xbf16>, vector<72x256xbf16>, vector<8x256xf32> -> vector<8x256xf32>
    %148 = vector.broadcast %88 : vector<8x1xf32> to vector<8x256xf32>
    %149 = arith.addf %147, %148 : vector<8x256xf32>
    %cst_83 = arith.constant 0.000000e+00 : f32
    %150 = vector.broadcast %cst_83 : f32 to vector<8x256xf32>
    %151 = arith.maximumf %149, %150 : vector<8x256xf32>
    %c0_84 = arith.constant 0 : index
    %c0_85 = arith.constant 0 : index
    %c0_86 = arith.constant 0 : index
    %152 = vector.load %arg6[%c0_84, %c0_85, %c0_86] : memref<1x4x72xbf16, #tpu.memory_space<vmem>>, vector<1x4x72xbf16>
    %153 = vector.shape_cast %152 : vector<1x4x72xbf16> to vector<4x72xbf16>
    %c0_87 = arith.constant 0 : index
    %c0_88 = arith.constant 0 : index
    %c0_89 = arith.constant 0 : index
    %154 = vector.load %arg7[%c0_87, %c0_88, %c0_89] : memref<1x4x1xf32, #tpu.memory_space<vmem>>, vector<1x4x1xf32>
    %155 = vector.shape_cast %154 : vector<1x4x1xf32> to vector<4x1xf32>
    %156 = vector.extract_strided_slice %151 {offsets = [0, 16], sizes = [8, 16], strides = [1, 1]} : vector<8x256xf32> to vector<8x16xf32>
    %157 = vector.extract_strided_slice %151 {offsets = [0, 224], sizes = [8, 16], strides = [1, 1]} : vector<8x256xf32> to vector<8x16xf32>
    %158 = tpu.concatenate %156, %151, %157 in 1 : vector<8x16xf32>, vector<8x256xf32>, vector<8x16xf32> -> vector<8x288xf32>
    %159 = tpu.iota {dimensions = array<i32: 1>} : vector<8x256xi32>
    %c16_i32_90 = arith.constant 16 : i32
    %c0_i32_91 = arith.constant 0 : i32
    %160 = arith.cmpi eq, %c16_i32_90, %c0_i32_91 : i32
    %c1_i32_92 = arith.constant 1 : i32
    %161 = arith.select %160, %c1_i32_92, %c16_i32_90 : i32
    %162 = vector.broadcast %161 : i32 to vector<8x256xi32>
    %163 = arith.remsi %159, %162 : vector<8x256xi32>
    %c0_i32_93 = arith.constant 0 : i32
    %164 = vector.broadcast %c0_i32_93 : i32 to vector<8x256xi32>
    %165 = arith.cmpi ne, %163, %164 : vector<8x256xi32>
    %c0_i32_94 = arith.constant 0 : i32
    %166 = vector.broadcast %c0_i32_94 : i32 to vector<8x256xi32>
    %167 = arith.cmpi slt, %163, %166 : vector<8x256xi32>
    %c0_i32_95 = arith.constant 0 : i32
    %168 = arith.cmpi slt, %161, %c0_i32_95 : i32
    %169 = vector.broadcast %168 : i1 to vector<8x256xi1>
    %170 = vector.broadcast %169 : vector<8x256xi1> to vector<8x256xi1>
    %171 = arith.xori %167, %170 : vector<8x256xi1>
    %172 = arith.andi %171, %165 : vector<8x256xi1>
    %173 = vector.broadcast %161 : i32 to vector<8x256xi32>
    %174 = arith.addi %163, %173 : vector<8x256xi32>
    %175 = arith.select %172, %174, %163 : vector<8x256xi1>, vector<8x256xi32>
    %176 = vector.extract_strided_slice %158 {offsets = [0, 0], sizes = [8, 256], strides = [1, 1]} : vector<8x288xf32> to vector<8x256xf32>
    %c1_i32_96 = arith.constant 1 : i32
    %177 = tpu.dynamic_rotate %176 by %c1_i32_96 dim 1 : vector<8x256xf32>, i32 -> vector<8x256xf32>
    %c255_i32_97 = arith.constant 255 : i32
    %178 = tpu.dynamic_rotate %176 by %c255_i32_97 dim 1 : vector<8x256xf32>, i32 -> vector<8x256xf32>
    %c0_i32_98 = arith.constant 0 : i32
    %179 = vector.broadcast %c0_i32_98 : i32 to vector<8x256xi32>
    %180 = arith.cmpi eq, %175, %179 : vector<8x256xi32>
    %181 = arith.select %180, %178, %177 : vector<8x256xi1>, vector<8x256xf32>
    %c15_i32_99 = arith.constant 15 : i32
    %182 = vector.broadcast %c15_i32_99 : i32 to vector<8x256xi32>
    %183 = arith.cmpi eq, %175, %182 : vector<8x256xi32>
    %184 = arith.select %183, %177, %178 : vector<8x256xi1>, vector<8x256xf32>
    %185 = vector.extract_strided_slice %158 {offsets = [0, 16], sizes = [8, 256], strides = [1, 1]} : vector<8x288xf32> to vector<8x256xf32>
    %c1_i32_100 = arith.constant 1 : i32
    %186 = tpu.dynamic_rotate %185 by %c1_i32_100 dim 1 : vector<8x256xf32>, i32 -> vector<8x256xf32>
    %c255_i32_101 = arith.constant 255 : i32
    %187 = tpu.dynamic_rotate %185 by %c255_i32_101 dim 1 : vector<8x256xf32>, i32 -> vector<8x256xf32>
    %c0_i32_102 = arith.constant 0 : i32
    %188 = vector.broadcast %c0_i32_102 : i32 to vector<8x256xi32>
    %189 = arith.cmpi eq, %175, %188 : vector<8x256xi32>
    %190 = arith.select %189, %187, %186 : vector<8x256xi1>, vector<8x256xf32>
    %c15_i32_103 = arith.constant 15 : i32
    %191 = vector.broadcast %c15_i32_103 : i32 to vector<8x256xi32>
    %192 = arith.cmpi eq, %175, %191 : vector<8x256xi32>
    %193 = arith.select %192, %186, %187 : vector<8x256xi1>, vector<8x256xf32>
    %194 = vector.extract_strided_slice %158 {offsets = [0, 32], sizes = [8, 256], strides = [1, 1]} : vector<8x288xf32> to vector<8x256xf32>
    %c1_i32_104 = arith.constant 1 : i32
    %195 = tpu.dynamic_rotate %194 by %c1_i32_104 dim 1 : vector<8x256xf32>, i32 -> vector<8x256xf32>
    %c255_i32_105 = arith.constant 255 : i32
    %196 = tpu.dynamic_rotate %194 by %c255_i32_105 dim 1 : vector<8x256xf32>, i32 -> vector<8x256xf32>
    %c0_i32_106 = arith.constant 0 : i32
    %197 = vector.broadcast %c0_i32_106 : i32 to vector<8x256xi32>
    %198 = arith.cmpi eq, %175, %197 : vector<8x256xi32>
    %199 = arith.select %198, %196, %195 : vector<8x256xi1>, vector<8x256xf32>
    %c15_i32_107 = arith.constant 15 : i32
    %200 = vector.broadcast %c15_i32_107 : i32 to vector<8x256xi32>
    %201 = arith.cmpi eq, %175, %200 : vector<8x256xi32>
    %202 = arith.select %201, %195, %196 : vector<8x256xi1>, vector<8x256xf32>
    %c0_108 = arith.constant 0 : index
    %c0_109 = arith.constant 0 : index
    %203 = vector.load %arg10[%c0_108, %c0_109] : memref<72x256xf32, #tpu.memory_space<vmem>>, vector<8x256xf32>
    tpu.vector_store %arg10[%c0_108, %c0_109], %181 {strides = array<i32>} : memref<72x256xf32, #tpu.memory_space<vmem>>, vector<8x256xf32>,
    %c8_110 = arith.constant 8 : index
    %c0_111 = arith.constant 0 : index
    %204 = vector.load %arg10[%c8_110, %c0_111] : memref<72x256xf32, #tpu.memory_space<vmem>>, vector<8x256xf32>
    tpu.vector_store %arg10[%c8_110, %c0_111], %176 {strides = array<i32>} : memref<72x256xf32, #tpu.memory_space<vmem>>, vector<8x256xf32>,
    %c16_112 = arith.constant 16 : index
    %c0_113 = arith.constant 0 : index
    %205 = vector.load %arg10[%c16_112, %c0_113] : memref<72x256xf32, #tpu.memory_space<vmem>>, vector<8x256xf32>
    tpu.vector_store %arg10[%c16_112, %c0_113], %184 {strides = array<i32>} : memref<72x256xf32, #tpu.memory_space<vmem>>, vector<8x256xf32>,
    %c24_114 = arith.constant 24 : index
    %c0_115 = arith.constant 0 : index
    %206 = vector.load %arg10[%c24_114, %c0_115] : memref<72x256xf32, #tpu.memory_space<vmem>>, vector<8x256xf32>
    tpu.vector_store %arg10[%c24_114, %c0_115], %190 {strides = array<i32>} : memref<72x256xf32, #tpu.memory_space<vmem>>, vector<8x256xf32>,
    %c32_116 = arith.constant 32 : index
    %c0_117 = arith.constant 0 : index
    %207 = vector.load %arg10[%c32_116, %c0_117] : memref<72x256xf32, #tpu.memory_space<vmem>>, vector<8x256xf32>
    tpu.vector_store %arg10[%c32_116, %c0_117], %185 {strides = array<i32>} : memref<72x256xf32, #tpu.memory_space<vmem>>, vector<8x256xf32>,
    %c40_118 = arith.constant 40 : index
    %c0_119 = arith.constant 0 : index
    %208 = vector.load %arg10[%c40_118, %c0_119] : memref<72x256xf32, #tpu.memory_space<vmem>>, vector<8x256xf32>
    tpu.vector_store %arg10[%c40_118, %c0_119], %193 {strides = array<i32>} : memref<72x256xf32, #tpu.memory_space<vmem>>, vector<8x256xf32>,
    %c48_120 = arith.constant 48 : index
    %c0_121 = arith.constant 0 : index
    %209 = vector.load %arg10[%c48_120, %c0_121] : memref<72x256xf32, #tpu.memory_space<vmem>>, vector<8x256xf32>
    tpu.vector_store %arg10[%c48_120, %c0_121], %199 {strides = array<i32>} : memref<72x256xf32, #tpu.memory_space<vmem>>, vector<8x256xf32>,
    %c56_122 = arith.constant 56 : index
    %c0_123 = arith.constant 0 : index
    %210 = vector.load %arg10[%c56_122, %c0_123] : memref<72x256xf32, #tpu.memory_space<vmem>>, vector<8x256xf32>
    tpu.vector_store %arg10[%c56_122, %c0_123], %194 {strides = array<i32>} : memref<72x256xf32, #tpu.memory_space<vmem>>, vector<8x256xf32>,
    %c64_124 = arith.constant 64 : index
    %c0_125 = arith.constant 0 : index
    %211 = vector.load %arg10[%c64_124, %c0_125] : memref<72x256xf32, #tpu.memory_space<vmem>>, vector<8x256xf32>
    tpu.vector_store %arg10[%c64_124, %c0_125], %202 {strides = array<i32>} : memref<72x256xf32, #tpu.memory_space<vmem>>, vector<8x256xf32>,
    %c0_126 = arith.constant 0 : index
    %c0_127 = arith.constant 0 : index
    %212 = vector.load %arg10[%c0_126, %c0_127] : memref<72x256xf32, #tpu.memory_space<vmem>>, vector<72x256xf32>
    %213 = arith.truncf %212 : vector<72x256xf32> to vector<72x256xbf16>
    %cst_128 = arith.constant dense<0.000000e+00> : vector<4x256xf32>
    %214 = tpu.matmul %153, %213, %cst_128 {dimension_numbers = #tpu.dot_dimension_numbers<[1], [0], [0], [1], [0, 0, 1, 1], [], []>} : vector<4x72xbf16>, vector<72x256xbf16>, vector<4x256xf32> -> vector<4x256xf32>
    %215 = vector.broadcast %155 : vector<4x1xf32> to vector<4x256xf32>
    %216 = arith.addf %214, %215 : vector<4x256xf32>
    %cst_129 = arith.constant 0.000000e+00 : f32
    %217 = vector.broadcast %cst_129 : f32 to vector<4x256xf32>
    %218 = arith.maximumf %216, %217 : vector<4x256xf32>
    %c0_130 = arith.constant 0 : index
    %c0_131 = arith.constant 0 : index
    %219 = vector.load %arg8[%c0_130, %c0_131] : memref<256x1024xf32, #tpu.memory_space<vmem>>, vector<256x1024xf32>
    %cst_132 = arith.constant dense<0.000000e+00> : vector<4x1024xf32>
    %220 = tpu.matmul %218, %219, %cst_132 {dimension_numbers = #tpu.dot_dimension_numbers<[1], [0], [0], [1], [0, 0, 1, 1], [], []>} : vector<4x256xf32>, vector<256x1024xf32>, vector<4x1024xf32> -> vector<4x1024xf32>
    %c0_133 = arith.constant 0 : index
    %c0_134 = arith.constant 0 : index
    %c0_135 = arith.constant 0 : index
    %221 = vector.load %arg9[%c0_133, %c0_134, %c0_135] : memref<1x4x1024xf32, #tpu.memory_space<vmem>>, vector<1x4x1024xf32>
    %222 = vector.shape_cast %221 : vector<1x4x1024xf32> to vector<4x1024xf32>
    %223 = vector.shape_cast %220 : vector<4x1024xf32> to vector<1x4x1024xf32>
    tpu.vector_store %arg9[%c0_133, %c0_134, %c0_135], %223 {strides = array<i32>} : memref<1x4x1024xf32, #tpu.memory_space<vmem>>, vector<1x4x1024xf32>,
    return
  }
  func.func @transform_0(%arg0: i32) -> (i32, i32, i32) {
    %c0_i32 = arith.constant 0 : i32
    %c0_i32_0 = arith.constant 0 : i32
    %c0_i32_1 = arith.constant 0 : i32
    return %arg0, %c0_i32, %c0_i32_0 : i32, i32, i32
  }
  func.func @transform_1(%arg0: i32) -> (i32, i32, i32) {
    %c0_i32 = arith.constant 0 : i32
    %c0_i32_0 = arith.constant 0 : i32
    %c0_i32_1 = arith.constant 0 : i32
    return %arg0, %c0_i32, %c0_i32_0 : i32, i32, i32
  }
  func.func @transform_2(%arg0: i32) -> (i32, i32, i32) {
    %c0_i32 = arith.constant 0 : i32
    %c0_i32_0 = arith.constant 0 : i32
    %c0_i32_1 = arith.constant 0 : i32
    return %arg0, %c0_i32, %c0_i32_0 : i32, i32, i32
  }
  func.func @transform_3(%arg0: i32) -> (i32, i32, i32) {
    %c0_i32 = arith.constant 0 : i32
    %c0_i32_0 = arith.constant 0 : i32
    %c0_i32_1 = arith.constant 0 : i32
    %c0_i32_2 = arith.constant 0 : i32
    return %c0_i32, %c0_i32_0, %c0_i32_1 : i32, i32, i32
  }
  func.func @transform_4(%arg0: i32) -> (i32, i32, i32) {
    %c0_i32 = arith.constant 0 : i32
    %c0_i32_0 = arith.constant 0 : i32
    %c0_i32_1 = arith.constant 0 : i32
    %c0_i32_2 = arith.constant 0 : i32
    return %c0_i32, %c0_i32_0, %c0_i32_1 : i32, i32, i32
  }
  func.func @transform_5(%arg0: i32) -> (i32, i32, i32) {
    %c0_i32 = arith.constant 0 : i32
    %c0_i32_0 = arith.constant 0 : i32
    %c0_i32_1 = arith.constant 0 : i32
    %c0_i32_2 = arith.constant 0 : i32
    return %c0_i32, %c0_i32_0, %c0_i32_1 : i32, i32, i32
  }
  func.func @transform_6(%arg0: i32) -> (i32, i32, i32) {
    %c0_i32 = arith.constant 0 : i32
    %c0_i32_0 = arith.constant 0 : i32
    %c0_i32_1 = arith.constant 0 : i32
    %c0_i32_2 = arith.constant 0 : i32
    return %c0_i32, %c0_i32_0, %c0_i32_1 : i32, i32, i32
  }
  func.func @transform_7(%arg0: i32) -> (i32, i32) {
    %c0_i32 = arith.constant 0 : i32
    %c0_i32_0 = arith.constant 0 : i32
    %c0_i32_1 = arith.constant 0 : i32
    return %c0_i32, %c0_i32_0 : i32, i32
  }
  func.func @transform_8(%arg0: i32) -> (i32, i32, i32) {
    %c0_i32 = arith.constant 0 : i32
    %c0_i32_0 = arith.constant 0 : i32
    %c0_i32_1 = arith.constant 0 : i32
    return %arg0, %c0_i32, %c0_i32_0 : i32, i32, i32
  }
}

</mosaic_0001>

<llo_original>
// kernel: decoder_block_forward.1
$region0: #{decoder_block_forward.1}
  #allocation0 [shape = 'u32[]', space=smem, size = 0x4, offset = 0x4, fixed_abs, tag = 'smem constant byte address 0x4 - core index']
  #allocation1 [shape = 'u32[144,128]{1,0:T(1,128)}', space=vmem, size = 0x12000, scoped, tag = 'internal scratch']
  #allocation2 [shape = 'f32[72,256]{1,0:T(8,128)}', space=vmem, size = 0x12000, scoped, tag = 'scratch operand']
  %s0 = inlined_call_operand.vmem [shape: f32[2,8,256], index: 0, kind: input, shape index: {}]
  %s1 = inlined_call_operand.vmem [shape: bf16[2,8,72], index: 1, kind: input, shape index: {}]
  %s2 = inlined_call_operand.vmem [shape: f32[2,8,1], index: 2, kind: input, shape index: {}]
  %s3 = inlined_call_operand.vmem [shape: bf16[1,8,72], index: 3, kind: input, shape index: {}]
  %s4 = inlined_call_operand.vmem [shape: f32[1,8,1], index: 4, kind: input, shape index: {}]
  %s5 = inlined_call_operand.vmem [shape: bf16[1,4,72], index: 5, kind: input, shape index: {}]
  %s6 = inlined_call_operand.vmem [shape: f32[1,4,1], index: 6, kind: input, shape index: {}]
  %s7 = inlined_call_operand.vmem [shape: f32[256,1024], index: 7, kind: input, shape index: {}]
  %s8 = inlined_call_operand.vmem [shape: f32[2,4,1024], index: 8, kind: output, shape index: {}]
  %s9 = sld [smem:[#allocation0]]
  $region65: #{decoder_block_forward.1} parent=0
    _
  %s11 = ssub.s32 1, %s9
  %s12 = scalar_select 0, %s11, %s9
  loop: start=0, step=1, limit=4
  $region2: #{decoder_block_forward.1} parent=0 // loop_pre_header
    _
  $region3: #{decoder_block_forward.1} parent=0 // loop_header
    %s14 = sphi 0, %s18
    %p15 = scmp.ge.s32.totalorder %s14, 4
    %s24 = sphi 0, %s26
    %s27 = sphi 0, %s24
    %s28 = sphi 0, %s27
    %s44 = sphi 0, %s28
    %s50 = sphi 0, %s52
    %s53 = sphi 0, %s50
    %s54 = sphi 0, %s53
    %s70 = sphi 0, %s54
    %s76 = sphi 0, %s78
    %s79 = sphi 0, %s76
    %s80 = sphi 0, %s79
    %s96 = sphi 0, %s80
    %s100 = sphi 0, %s100
    %s102 = sphi 0, %s100
    %s103 = sphi 0, %s102
    %s117 = sphi 0, %s103
    %s121 = sphi 0, %s121
    %s123 = sphi 0, %s121
    %s124 = sphi 0, %s123
    %s138 = sphi 0, %s124
    %s142 = sphi 0, %s142
    %s144 = sphi 0, %s142
    %s145 = sphi 0, %s144
    %s159 = sphi 0, %s145
    %s163 = sphi 0, %s163
    %s165 = sphi 0, %s163
    %s166 = sphi 0, %s165
    %s180 = sphi 0, %s166
    %s184 = sphi 0, %s184
    %s186 = sphi 0, %s184
    %s187 = sphi 0, %s186
    %s201 = sphi 0, %s187
    %s207 = sphi 0, %s209
    %s210 = sphi 0, %s207
    %s211 = sphi 0, %s210
    %s227 = sphi 0, %s211
  $region4: #{decoder_block_forward.1} parent=0 // loop_header_branch
    %17 = sbr.rel (%p15) target = $region8
  $region5: #{decoder_block_forward.1} parent=0 // loop_body
    %s19 = ssub.s32 %s14, 1
    %s20 = ssub.s32 %s14, 2
    %s21 = sadd.s32 %s14, 1
    %s22 = ssub.s32 %s14, %s21
    %p23 = scmp.eq.s32.totalorder %s22, 0
    %s25 = sadd.s32 %s24, 1
    %s26 = scalar_select %p23, %s24, %s25
    %p29 = pneg %p23
    %p30 = scmp.eq.s32.totalorder %s14, 1
    %p31 = por %p29, %p30
    %p32 = scmp.ne.s32.totalorder %s24, %s27
    %p33 = scmp.eq.s32.totalorder %s14, 0
    %p34 = por %p32, %p33
    %p35 = scmp.ne.s32.totalorder %s24, %s27
    %p36 = scmp.eq.s32.totalorder %s19, 1
    %p37 = por %p35, %p36
    %p38 = scmp.ne.s32.totalorder %s27, %s28
    %p39 = scmp.eq.s32.totalorder %s19, 0
    %p40 = por %p38, %p39
    %p41 = scmp.ne.s32.totalorder %s27, %s28
    %p42 = scmp.eq.s32.totalorder %s20, 1
    %p43 = por %p41, %p42
    %p45 = scmp.ne.s32.totalorder %s28, %s44
    %p46 = scmp.eq.s32.totalorder %s20, 0
    %p47 = por %p45, %p46
    %s48 = ssub.s32 %s14, %s21
    %p49 = scmp.eq.s32.totalorder %s48, 0
    %s51 = sadd.s32 %s50, 1
    %s52 = scalar_select %p49, %s50, %s51
    %p55 = pneg %p49
    %p56 = scmp.eq.s32.totalorder %s14, 1
    %p57 = por %p55, %p56
    %p58 = scmp.ne.s32.totalorder %s50, %s53
    %p59 = scmp.eq.s32.totalorder %s14, 0
    %p60 = por %p58, %p59
    %p61 = scmp.ne.s32.totalorder %s50, %s53
    %p62 = scmp.eq.s32.totalorder %s19, 1
    %p63 = por %p61, %p62
    %p64 = scmp.ne.s32.totalorder %s53, %s54
    %p65 = scmp.eq.s32.totalorder %s19, 0
    %p66 = por %p64, %p65
    %p67 = scmp.ne.s32.totalorder %s53, %s54
    %p68 = scmp.eq.s32.totalorder %s20, 1
    %p69 = por %p67, %p68
    %p71 = scmp.ne.s32.totalorder %s54, %s70
    %p72 = scmp.eq.s32.totalorder %s20, 0
    %p73 = por %p71, %p72
    %s74 = ssub.s32 %s14, %s21
    %p75 = scmp.eq.s32.totalorder %s74, 0
    %s77 = sadd.s32 %s76, 1
    %s78 = scalar_select %p75, %s76, %s77
    %p81 = pneg %p75
    %p82 = scmp.eq.s32.totalorder %s14, 1
    %p83 = por %p81, %p82
    %p84 = scmp.ne.s32.totalorder %s76, %s79
    %p85 = scmp.eq.s32.totalorder %s14, 0
    %p86 = por %p84, %p85
    %p87 = scmp.ne.s32.totalorder %s76, %s79
    %p88 = scmp.eq.s32.totalorder %s19, 1
    %p89 = por %p87, %p88
    %p90 = scmp.ne.s32.totalorder %s79, %s80
    %p91 = scmp.eq.s32.totalorder %s19, 0
    %p92 = por %p90, %p91
    %p93 = scmp.ne.s32.totalorder %s79, %s80
    %p94 = scmp.eq.s32.totalorder %s20, 1
    %p95 = por %p93, %p94
    %p97 = scmp.ne.s32.totalorder %s80, %s96
    %p98 = scmp.eq.s32.totalorder %s20, 0
    %p99 = por %p97, %p98
    %s101 = sadd.s32 %s100, 1
    %p104 = scmp.eq.s32.totalorder %s14, 1
    %p105 = scmp.ne.s32.totalorder %s100, %s102
    %p106 = scmp.eq.s32.totalorder %s14, 0
    %p107 = por %p105, %p106
    %p108 = scmp.ne.s32.totalorder %s100, %s102
    %p109 = scmp.eq.s32.totalorder %s19, 1
    %p110 = por %p108, %p109
    %p111 = scmp.ne.s32.totalorder %s102, %s103
    %p112 = scmp.eq.s32.totalorder %s19, 0
    %p113 = por %p111, %p112
    %p114 = scmp.ne.s32.totalorder %s102, %s103
    %p115 = scmp.eq.s32.totalorder %s20, 1
    %p116 = por %p114, %p115
    %p118 = scmp.ne.s32.totalorder %s103, %s117
    %p119 = scmp.eq.s32.totalorder %s20, 0
    %p120 = por %p118, %p119
    %s122 = sadd.s32 %s121, 1
    %p125 = scmp.eq.s32.totalorder %s14, 1
    %p126 = scmp.ne.s32.totalorder %s121, %s123
    %p127 = scmp.eq.s32.totalorder %s14, 0
    %p128 = por %p126, %p127
    %p129 = scmp.ne.s32.totalorder %s121, %s123
    %p130 = scmp.eq.s32.totalorder %s19, 1
    %p131 = por %p129, %p130
    %p132 = scmp.ne.s32.totalorder %s123, %s124
    %p133 = scmp.eq.s32.totalorder %s19, 0
    %p134 = por %p132, %p133
    %p135 = scmp.ne.s32.totalorder %s123, %s124
    %p136 = scmp.eq.s32.totalorder %s20, 1
    %p137 = por %p135, %p136
    %p139 = scmp.ne.s32.totalorder %s124, %s138
    %p140 = scmp.eq.s32.totalorder %s20, 0
    %p141 = por %p139, %p140
    %s143 = sadd.s32 %s142, 1
    %p146 = scmp.eq.s32.totalorder %s14, 1
    %p147 = scmp.ne.s32.totalorder %s142, %s144
    %p148 = scmp.eq.s32.totalorder %s14, 0
    %p149 = por %p147, %p148
    %p150 = scmp.ne.s32.totalorder %s142, %s144
    %p151 = scmp.eq.s32.totalorder %s19, 1
    %p152 = por %p150, %p151
    %p153 = scmp.ne.s32.totalorder %s144, %s145
    %p154 = scmp.eq.s32.totalorder %s19, 0
    %p155 = por %p153, %p154
    %p156 = scmp.ne.s32.totalorder %s144, %s145
    %p157 = scmp.eq.s32.totalorder %s20, 1
    %p158 = por %p156, %p157
    %p160 = scmp.ne.s32.totalorder %s145, %s159
    %p161 = scmp.eq.s32.totalorder %s20, 0
    %p162 = por %p160, %p161
    %s164 = sadd.s32 %s163, 1
    %p167 = scmp.eq.s32.totalorder %s14, 1
    %p168 = scmp.ne.s32.totalorder %s163, %s165
    %p169 = scmp.eq.s32.totalorder %s14, 0
    %p170 = por %p168, %p169
    %p171 = scmp.ne.s32.totalorder %s163, %s165
    %p172 = scmp.eq.s32.totalorder %s19, 1
    %p173 = por %p171, %p172
    %p174 = scmp.ne.s32.totalorder %s165, %s166
    %p175 = scmp.eq.s32.totalorder %s19, 0
    %p176 = por %p174, %p175
    %p177 = scmp.ne.s32.totalorder %s165, %s166
    %p178 = scmp.eq.s32.totalorder %s20, 1
    %p179 = por %p177, %p178
    %p181 = scmp.ne.s32.totalorder %s166, %s180
    %p182 = scmp.eq.s32.totalorder %s20, 0
    %p183 = por %p181, %p182
    %s185 = sadd.s32 %s184, 1
    %p188 = scmp.eq.s32.totalorder %s14, 1
    %p189 = scmp.ne.s32.totalorder %s184, %s186
    %p190 = scmp.eq.s32.totalorder %s14, 0
    %p191 = por %p189, %p190
    %p192 = scmp.ne.s32.totalorder %s184, %s186
    %p193 = scmp.eq.s32.totalorder %s19, 1
    %p194 = por %p192, %p193
    %p195 = scmp.ne.s32.totalorder %s186, %s187
    %p196 = scmp.eq.s32.totalorder %s19, 0
    %p197 = por %p195, %p196
    %p198 = scmp.ne.s32.totalorder %s186, %s187
    %p199 = scmp.eq.s32.totalorder %s20, 1
    %p200 = por %p198, %p199
    %p202 = scmp.ne.s32.totalorder %s187, %s201
    %p203 = scmp.eq.s32.totalorder %s20, 0
    %p204 = por %p202, %p203
    %s205 = ssub.s32 %s14, %s21
    %p206 = scmp.eq.s32.totalorder %s205, 0
    %s208 = sadd.s32 %s207, 1
    %s209 = scalar_select %p206, %s207, %s208
    %p212 = pneg %p206
    %p213 = scmp.eq.s32.totalorder %s14, 1
    %p214 = por %p212, %p213
    %p215 = scmp.ne.s32.totalorder %s207, %s210
    %p216 = scmp.eq.s32.totalorder %s14, 0
    %p217 = por %p215, %p216
    %p218 = scmp.ne.s32.totalorder %s207, %s210
    %p219 = scmp.eq.s32.totalorder %s19, 1
    %p220 = por %p218, %p219
    %p221 = scmp.ne.s32.totalorder %s210, %s211
    %p222 = scmp.eq.s32.totalorder %s19, 0
    %p223 = por %p221, %p222
    %p224 = scmp.ne.s32.totalorder %s210, %s211
    %p225 = scmp.eq.s32.totalorder %s20, 1
    %p226 = por %p224, %p225
    %p228 = scmp.ne.s32.totalorder %s211, %s227
    %p229 = scmp.eq.s32.totalorder %s20, 0
    %p230 = por %p228, %p229
    %p231 = scmp.le.s32.totalorder 1, %s14
    %p232 = scmp.lt.s32.totalorder %s14, 3
    %p233 = pnand %p231, %p232
    %p234 = pneg %p233
    // Predicated region
    $region9: #{decoder_block_forward.1} parent=5 // pred_check
      _
    $region10: #{decoder_block_forward.1} parent=5 // pred_check_branch
      %236 = sbr.rel (%p233) target = $region12
    $region11: #{decoder_block_forward.1} parent=5 // pred_region
      %s237 = ssub.s32 %s14, 1
      // Predicated region
      $region13: #{decoder_block_forward.1} parent=11 // pred_check
        %p238 = pneg %p113
      $region14: #{decoder_block_forward.1} parent=11 // pred_check_branch
        %240 = sbr.rel (%p238) target = $region16
      $region15: #{decoder_block_forward.1} parent=11 // pred_region
        _
      $region16: #{decoder_block_forward.1} parent=11 // pred_fallthru
        _
      // Predicated region
      $region17: #{decoder_block_forward.1} parent=11 // pred_check
        %p241 = pneg %p134
      $region18: #{decoder_block_forward.1} parent=11 // pred_check_branch
        %243 = sbr.rel (%p241) target = $region20
      $region19: #{decoder_block_forward.1} parent=11 // pred_region
        _
      $region20: #{decoder_block_forward.1} parent=11 // pred_fallthru
        _
      // Predicated region
      $region21: #{decoder_block_forward.1} parent=11 // pred_check
        %p244 = pneg %p155
      $region22: #{decoder_block_forward.1} parent=11 // pred_check_branch
        %246 = sbr.rel (%p244) target = $region24
      $region23: #{decoder_block_forward.1} parent=11 // pred_region
        _
      $region24: #{decoder_block_forward.1} parent=11 // pred_fallthru
        _
      // Predicated region
      $region25: #{decoder_block_forward.1} parent=11 // pred_check
        %p247 = pneg %p176
      $region26: #{decoder_block_forward.1} parent=11 // pred_check_branch
        %249 = sbr.rel (%p247) target = $region28
      $region27: #{decoder_block_forward.1} parent=11 // pred_region
        _
      $region28: #{decoder_block_forward.1} parent=11 // pred_fallthru
        _
      // Predicated region
      $region29: #{decoder_block_forward.1} parent=11 // pred_check
        %p250 = pneg %p197
      $region30: #{decoder_block_forward.1} parent=11 // pred_check_branch
        %252 = sbr.rel (%p250) target = $region32
      $region31: #{decoder_block_forward.1} parent=11 // pred_region
        _
      $region32: #{decoder_block_forward.1} parent=11 // pred_fallthru
        _
    $region12: #{decoder_block_forward.1} parent=5 // pred_fallthru
      _
    %p253 = scmp.lt.s32.totalorder %s14, 2
    // Predicated region
    $region33: #{decoder_block_forward.1} parent=5 // pred_check
      %p254 = pneg %p253
    $region34: #{decoder_block_forward.1} parent=5 // pred_check_branch
      %256 = sbr.rel (%p254) target = $region36
    $region35: #{decoder_block_forward.1} parent=5 // pred_region
      // Predicated region
      $region37: #{decoder_block_forward.1} parent=35 // pred_check
        %p257 = pneg %p34
      $region38: #{decoder_block_forward.1} parent=35 // pred_check_branch
        %259 = sbr.rel (%p257) target = $region40
      $region39: #{decoder_block_forward.1} parent=35 // pred_region
        %p260 = scmp.lt.s32.totalorder %s14, 1
        %s261 = scalar_select %p260, %s14, 1
        %s262 = smul.addr %s261, 2
        %s263 = smul.addr %s262, 8
        %s264 = scalar_lea.vmem %s0, %s263
      $region40: #{decoder_block_forward.1} parent=35 // pred_fallthru
        _
      // Predicated region
      $region41: #{decoder_block_forward.1} parent=35 // pred_check
        %p265 = pneg %p60
      $region42: #{decoder_block_forward.1} parent=35 // pred_check_branch
        %267 = sbr.rel (%p265) target = $region44
      $region43: #{decoder_block_forward.1} parent=35 // pred_region
        %p268 = scmp.lt.s32.totalorder %s14, 1
        %s269 = scalar_select %p268, %s14, 1
        %s270 = smul.addr %s269, 4
        %s271 = scalar_lea.vmem %s1, %s270
      $region44: #{decoder_block_forward.1} parent=35 // pred_fallthru
        _
      // Predicated region
      $region45: #{decoder_block_forward.1} parent=35 // pred_check
        %p272 = pneg %p86
      $region46: #{decoder_block_forward.1} parent=35 // pred_check_branch
        %274 = sbr.rel (%p272) target = $region48
      $region47: #{decoder_block_forward.1} parent=35 // pred_region
        %p275 = scmp.lt.s32.totalorder %s14, 1
        %s276 = scalar_select %p275, %s14, 1
        %s277 = smul.addr %s276, 8
        %s278 = scalar_lea.vmem %s2, %s277
      $region48: #{decoder_block_forward.1} parent=35 // pred_fallthru
        _
    $region36: #{decoder_block_forward.1} parent=5 // pred_fallthru
      _
    %p279 = scmp.le.s32.totalorder 1, %s14
    %p280 = scmp.lt.s32.totalorder %s14, 3
    %p281 = pnand %p279, %p280
    %p282 = pneg %p281
    // Predicated region
    $region49: #{decoder_block_forward.1} parent=5 // pred_check
      _
    $region50: #{decoder_block_forward.1} parent=5 // pred_check_branch
      %284 = sbr.rel (%p281) target = $region52
    $region51: #{decoder_block_forward.1} parent=5 // pred_region
      %s285 = ssub.s32 %s14, 1
      %p286 = scmp.lt.s32.totalorder %s19, 1
      %s287 = scalar_select %p286, %s19, 1
      %s288 = smul.addr %s287, 2
      %s289 = smul.addr %s288, 8
      %s290 = scalar_lea.vmem %s0, %s289
      %p291 = pneg %p40
      %p292 = pneg %p37
      %p293 = scmp.lt.s32.totalorder %s19, 1
      %s294 = scalar_select %p293, %s19, 1
      %s295 = smul.addr %s294, 4
      %s296 = scalar_lea.vmem %s1, %s295
      %p297 = pneg %p66
      %p298 = pneg %p63
      %p299 = scmp.lt.s32.totalorder %s19, 1
      %s300 = scalar_select %p299, %s19, 1
      %s301 = smul.addr %s300, 8
      %s302 = scalar_lea.vmem %s2, %s301
      %p303 = pneg %p92
      %p304 = pneg %p89
      %p305 = pneg %p113
      %p306 = pneg %p110
      %p307 = pneg %p134
      %p308 = pneg %p131
      %p309 = pneg %p155
      %p310 = pneg %p152
      %p311 = pneg %p176
      %p312 = pneg %p173
      %p313 = pneg %p197
      %p314 = pneg %p194
      %p315 = pneg %p223
      %p316 = pneg %p220
      %p317 = scmp.lt.s32.totalorder %s19, 1
      %s318 = scalar_select %p317, %s19, 1
      %s319 = smul.addr %s318, 8
      %s320 = smul.addr %s319, 4
      %s321 = scalar_lea.vmem %s8, %s320
      %p322 = scmp.lt.s32.totalorder %s19, 1
      %s323 = scalar_select %p322, %s19, 1
      %s324 = smul.addr %s323, 2
      %s325 = smul.addr %s324, 8
      %s326 = scalar_lea.vmem %s0, %s325
      %p327 = scmp.lt.s32.totalorder %s19, 1
      %s328 = scalar_select %p327, %s19, 1
      %s329 = smul.addr %s328, 4
      %s330 = scalar_lea.vmem %s1, %s329
      %p331 = scmp.lt.s32.totalorder %s19, 1
      %s332 = scalar_select %p331, %s19, 1
      %s333 = smul.addr %s332, 8
      %s334 = scalar_lea.vmem %s2, %s333
      %p335 = scmp.lt.s32.totalorder %s19, 1
      %s336 = scalar_select %p335, %s19, 1
      %s337 = smul.addr %s336, 8
      %s338 = smul.addr %s337, 4
      %s339 = scalar_lea.vmem %s8, %s338
      %v341 = vld [vmem:[%s326] sm:$0xff]
      %v342 = vld [vmem:[%s326 + $0x8] sm:$0xff]
      %v343 = vadd.f32 %v341, %v342
      %344 = vadd.xlane.f32.xlu0 %v343
      %v345 = vpop.xlane.xlu0 %344
      %v346 = vrcp.pop 256.0
      %v347 = vmul.f32 %v345, %v346
      %v348 = vsub.f32 %v341, %v347
      %v349 = vsub.f32 %v342, %v347
      %v350 = vmul.f32 %v348, %v348
      %v351 = vmul.f32 %v349, %v349
      %v352 = vadd.f32 %v350, %v351
      %353 = vadd.xlane.f32.xlu0 %v352
      %v354 = vpop.xlane.xlu0 %353
      %v355 = vmul.f32 %v354, %v346
      %v356 = vadd.f32 %v355, 1e-05
      %v357 = vrsqrt.pop %v356
      %v358 = vmul.f32 %v348, %v357
      %v359 = vmul.f32 %v349, %v357
      %361 = vrot.lane.b32.xlu0 %v358, 112
      %v362 = vpop.permute.xlu0 %361
      %365 = vrot.lane.b32.xlu0 %v358, 16
      %v366 = vpop.permute.xlu0 %365
      %367 = vrot.lane.b32.xlu0 %v359, 16
      %v368 = vpop.permute.xlu0 %367
      %vm369 = vcmask 130048
      %v370 = vsel %vm369, %v366, %v368
      %374 = vrot.lane.b32.xlu0 %v359, 48
      %v375 = vpop.permute.xlu0 %374
      %v377 = vsel %vm369, %v362, %v366
      %v378 = vsel %vm369, %v368, %v375
      %v379 = vlaneseq
      %v380 = vand.u32 %v379, 127
      %v381 = vadd.s32 %v380, 128
      %vm382 = vcmp.lt.s32.totalorder %v380, 0
      %v383 = vsub.s32 0, %v380
      %v384 = vsel %vm382, %v383, %v380
      %v385 = vshrl.u32 %v384, 4
      %v386 = vand.u32 %v384, 15
      %v387 = vsub.s32 0, %v386
      %v388 = vsel %vm382, %v387, %v386
      %vm389 = vcmp.lt.s32.totalorder %v381, 0
      %v390 = vsub.s32 0, %v381
      %v391 = vsel %vm389, %v390, %v381
      %v392 = vshrl.u32 %v391, 4
      %v393 = vand.u32 %v391, 15
      %v394 = vsub.s32 0, %v393
      %v395 = vsel %vm389, %v394, %v393
      %vm396 = vcmp.ne.s32.totalorder %v388, 0
      %vm397 = vcmp.ne.s32.totalorder %v395, 0
      %vm398 = vcmp.lt.s32.totalorder %v388, 0
      %vm399 = vcmp.lt.s32.totalorder %v395, 0
      %vm400 = vmand %vm398, %vm396
      %vm401 = vmand %vm399, %vm397
      %v402 = vadd.s32 %v388, 16
      %v403 = vadd.s32 %v395, 16
      %v404 = vsel %vm400, %v402, %v388
      %v405 = vsel %vm401, %v403, %v395
      %406 = vrot.lane.b32.xlu0 %v377, 1
      %v407 = vpop.permute.xlu0 %406
      %408 = vrot.lane.b32.xlu0 %v370, 1
      %v409 = vpop.permute.xlu0 %408
      %vm410 = vcmp.lt.s32.totalorder %v380, 1
      %v411 = vsel %vm410, %v407, %v409
      %v412 = vsel %vm410, %v409, %v407
      %413 = vrot.lane.b32.xlu0 %v377, 127
      %v414 = vpop.permute.xlu0 %413
      %415 = vrot.lane.b32.xlu0 %v370, 127
      %v416 = vpop.permute.xlu0 %415
      %vm417 = vcmp.lt.s32.totalorder %v380, 127
      %v418 = vsel %vm417, %v414, %v416
      %v419 = vsel %vm417, %v416, %v414
      %vm420 = vcmp.eq.s32.totalorder %v404, 0
      %vm421 = vcmp.eq.s32.totalorder %v405, 0
      %v422 = vsel %vm420, %v418, %v412
      %v423 = vsel %vm421, %v419, %v411
      %vm424 = vcmp.eq.s32.totalorder %v404, 15
      %vm425 = vcmp.eq.s32.totalorder %v405, 15
      %v426 = vsel %vm424, %v412, %v418
      %v427 = vsel %vm425, %v411, %v419
      %430 = vrot.lane.b32.xlu0 %v377, 112
      %v431 = vpop.permute.xlu0 %430
      %432 = vrot.lane.b32.xlu0 %v370, 112
      %v433 = vpop.permute.xlu0 %432
      %434 = vrot.lane.b32.xlu0 %v378, 112
      %v435 = vpop.permute.xlu0 %434
      %vm436 = vcmask 916480
      %v437 = vsel %vm436, %v431, %v433
      %v438 = vsel %vm436, %v433, %v435
      %441 = vrot.lane.b32.xlu0 %v437, 1
      %v442 = vpop.permute.xlu0 %441
      %443 = vrot.lane.b32.xlu0 %v438, 1
      %v444 = vpop.permute.xlu0 %443
      %v445 = vsel %vm410, %v442, %v444
      %v446 = vsel %vm410, %v444, %v442
      %447 = vrot.lane.b32.xlu0 %v437, 127
      %v448 = vpop.permute.xlu0 %447
      %449 = vrot.lane.b32.xlu0 %v438, 127
      %v450 = vpop.permute.xlu0 %449
      %v451 = vsel %vm417, %v448, %v450
      %v452 = vsel %vm417, %v450, %v448
      %v453 = vsel %vm420, %v451, %v446
      %v454 = vsel %vm421, %v452, %v445
      %v455 = vsel %vm424, %v446, %v451
      %v456 = vsel %vm425, %v445, %v452
      %457 = vrot.lane.b32.xlu0 %v377, 96
      %v458 = vpop.permute.xlu0 %457
      %459 = vrot.lane.b32.xlu0 %v370, 96
      %v460 = vpop.permute.xlu0 %459
      %461 = vrot.lane.b32.xlu0 %v378, 96
      %v462 = vpop.permute.xlu0 %461
      %vm463 = vcmask 785408
      %v464 = vsel %vm463, %v458, %v460
      %v465 = vsel %vm463, %v460, %v462
      %468 = vrot.lane.b32.xlu0 %v464, 1
      %v469 = vpop.permute.xlu0 %468
      %470 = vrot.lane.b32.xlu0 %v465, 1
      %v471 = vpop.permute.xlu0 %470
      %v472 = vsel %vm410, %v469, %v471
      %v473 = vsel %vm410, %v471, %v469
      %474 = vrot.lane.b32.xlu0 %v464, 127
      %v475 = vpop.permute.xlu0 %474
      %476 = vrot.lane.b32.xlu0 %v465, 127
      %v477 = vpop.permute.xlu0 %476
      %v478 = vsel %vm417, %v475, %v477
      %v479 = vsel %vm417, %v477, %v475
      %v480 = vsel %vm420, %v478, %v473
      %v481 = vsel %vm421, %v479, %v472
      %v482 = vsel %vm424, %v473, %v478
      %v483 = vsel %vm425, %v472, %v479
      %484 = vst [vmem:[#allocation2] sm:$0xff] %v422
      %485 = vst [vmem:[#allocation2 + $0x8] sm:$0xff] %v423
      %486 = vst [vmem:[#allocation2 + $0x10] sm:$0xff] %v377
      %487 = vst [vmem:[#allocation2 + $0x18] sm:$0xff] %v370
      %488 = vst [vmem:[#allocation2 + $0x20] sm:$0xff] %v426
      %489 = vst [vmem:[#allocation2 + $0x28] sm:$0xff] %v427
      %490 = vst [vmem:[#allocation2 + $0x30] sm:$0xff] %v453
      %491 = vst [vmem:[#allocation2 + $0x38] sm:$0xff] %v454
      %492 = vst [vmem:[#allocation2 + $0x40] sm:$0xff] %v437
      %493 = vst [vmem:[#allocation2 + $0x48] sm:$0xff] %v438
      %494 = vst [vmem:[#allocation2 + $0x50] sm:$0xff] %v455
      %495 = vst [vmem:[#allocation2 + $0x58] sm:$0xff] %v456
      %496 = vst [vmem:[#allocation2 + $0x60] sm:$0xff] %v480
      %497 = vst [vmem:[#allocation2 + $0x68] sm:$0xff] %v481
      %498 = vst [vmem:[#allocation2 + $0x70] sm:$0xff] %v464
      %499 = vst [vmem:[#allocation2 + $0x78] sm:$0xff] %v465
      %500 = vst [vmem:[#allocation2 + $0x80] sm:$0xff] %v482
      %501 = vst [vmem:[#allocation2 + $0x88] sm:$0xff] %v483
      %v502 = vld [vmem:[%s330] sm:$0xf]
      %v503 = vld [vmem:[#allocation2] sm:$0xff]
      %v504 = vld [vmem:[#allocation2 + $0x8] sm:$0xff]
      %v505 = vld [vmem:[#allocation2 + $0x10] sm:$0xff]
      %v506 = vld [vmem:[#allocation2 + $0x18] sm:$0xff]
      %v507 = vld [vmem:[#allocation2 + $0x20] sm:$0xff]
      %v508 = vld [vmem:[#allocation2 + $0x28] sm:$0xff]
      %v509 = vld [vmem:[#allocation2 + $0x30] sm:$0xff]
      %v510 = vld [vmem:[#allocation2 + $0x38] sm:$0xff]
      %v511 = vld [vmem:[#allocation2 + $0x40] sm:$0xff]
      %v512 = vld [vmem:[#allocation2 + $0x48] sm:$0xff]
      %v513 = vld [vmem:[#allocation2 + $0x50] sm:$0xff]
      %v514 = vld [vmem:[#allocation2 + $0x58] sm:$0xff]
      %v515 = vld [vmem:[#allocation2 + $0x60] sm:$0xff]
      %v516 = vld [vmem:[#allocation2 + $0x68] sm:$0xff]
      %v517 = vld [vmem:[#allocation2 + $0x70] sm:$0xff]
      %v518 = vld [vmem:[#allocation2 + $0x78] sm:$0xff]
      %v519 = vld [vmem:[#allocation2 + $0x80] sm:$0xff]
      %v520 = vld [vmem:[#allocation2 + $0x88] sm:$0xff]
      %v521 = vpack.c.bf16 %v505, %v503
      %v522 = vpack.c.bf16 %v506, %v504
      %v523 = vpack.c.bf16 %v509, %v507
      %v524 = vpack.c.bf16 %v510, %v508
      %v525 = vpack.c.bf16 %v513, %v511
      %v526 = vpack.c.bf16 %v514, %v512
      %v527 = vpack.c.bf16 %v517, %v515
      %v528 = vpack.c.bf16 %v518, %v516
      %v529 = vpack.c.bf16 %v519, %v519
      %v530 = vpack.c.bf16 %v520, %v520
      %v531 = vld [vmem:[%s334] sm:$0xff]
      %533 = vset.pattern.permute.xlu0 0
      %534 = vperm.xlu0 %533, %v531
      %v535 = vpop.permute.xlu0 %534
      %vm537 = vcmask 588800
      %v539 = vsel %vm537, %v502, 0
      %vm541 = vcmask 1043456
      %v543 = vsel %vm541, %v529, 0
      %v546 = vsel %vm541, %v530, 0
      %548 = vmatprep.subr.bf16.mxu0 %v522
      %549 = vmatpush1.bf16.msra.mxu0 %v521
      %550 = vmatprep.subr.bf16.mxu0 %v524
      %551 = vmatpush1.bf16.msra.mxu0 %v523
      %552 = vmatprep.subr.bf16.mxu0 %v526
      %553 = vmatpush1.bf16.msra.mxu0 %v525
      %554 = vmatprep.subr.bf16.mxu0 %v528
      %555 = vmatpush1.bf16.msra.mxu0 %v527
      %556 = vmatprep.subr.bf16.mxu0 %v546
      %557 = vmatpush1.bf16.msra.mxu0 %v543
      %558 = vmatprep.subr.bf16.mxu0 0
      %559 = vmatpush1.bf16.msra.mxu0 0
      %560 = vmatprep.subr.bf16.mxu0 0
      %561 = vmatpush1.bf16.msra.mxu0 0
      %562 = vmatprep.subr.bf16.mxu0 0
      %563 = vmatpush1.bf16.msra.mxu0 0
      %564 = vmatprep.subr.bf16.mxu0 0
      %565 = vmatpush1.bf16.msra.mxu0 0
      %566 = vmatprep.subr.bf16.mxu0 0
      %567 = vmatpush1.bf16.msra.mxu0 0
      %568 = vmatprep.subr.bf16.mxu0 0
      %569 = vmatpush1.bf16.msra.mxu0 0
      %570 = vmatprep.subr.bf16.mxu0 0
      %571 = vmatpush1.bf16.msra.mxu0 0
      %572 = vmatprep.subr.bf16.mxu0 0
      %573 = vmatpush1.bf16.msra.mxu0 0
      %574 = vmatprep.subr.bf16.mxu0 0
      %575 = vmatpush1.bf16.msra.mxu0 0
      %576 = vmatprep.subr.bf16.mxu0 0
      %577 = vmatpush1.bf16.msra.mxu0 0
      %578 = vmatprep.subr.bf16.mxu0 0
      %579 = vmatpush1.bf16.msra.mxu0 0
      %580 = vmatprep.mubr.bf16.mxu0 0
      %581 = vmatmul.mubr.bf16.gmra.mrb[0].mxu0 %v539
      %v582 = vpop.f32.mrb[0].mxu0
      %v583 = vadd.f32 %v535, %v582
      %v584 = vpop.f32.mrb[0].mxu0
      %v585 = vadd.f32 %v535, %v584
      %v586 = vpop.f32.mrb[0].mxu0
      %v587 = vpop.f32.mrb[0].mxu0
      %588 = vdwg.mxu0
      %v589 = vld [vmem:[%s3] sm:$0xf]
      %v590 = vld [vmem:[%s4] sm:$0xff]
      %592 = vrot.lane.b32.xlu0 %v583, 112
      %v593 = vpop.permute.xlu0 %592
      %596 = vrot.lane.b32.xlu0 %v583, 16
      %v597 = vpop.permute.xlu0 %596
      %598 = vrot.lane.b32.xlu0 %v585, 16
      %v599 = vpop.permute.xlu0 %598
      %v600 = vsel %vm369, %v597, %v599
      %604 = vrot.lane.b32.xlu0 %v585, 48
      %v605 = vpop.permute.xlu0 %604
      %v607 = vsel %vm369, %v593, %v597
      %v608 = vsel %vm369, %v599, %v605
      %609 = vrot.lane.b32.xlu0 %v607, 1
      %v610 = vpop.permute.xlu0 %609
      %611 = vrot.lane.b32.xlu0 %v600, 1
      %v612 = vpop.permute.xlu0 %611
      %v613 = vsel %vm410, %v610, %v612
      %v614 = vsel %vm410, %v612, %v610
      %615 = vrot.lane.b32.xlu0 %v607, 127
      %v616 = vpop.permute.xlu0 %615
      %617 = vrot.lane.b32.xlu0 %v600, 127
      %v618 = vpop.permute.xlu0 %617
      %v619 = vsel %vm417, %v616, %v618
      %v620 = vsel %vm417, %v618, %v616
      %v621 = vsel %vm420, %v619, %v614
      %v622 = vsel %vm421, %v620, %v613
      %v623 = vsel %vm424, %v614, %v619
      %v624 = vsel %vm425, %v613, %v620
      %627 = vrot.lane.b32.xlu0 %v607, 112
      %v628 = vpop.permute.xlu0 %627
      %629 = vrot.lane.b32.xlu0 %v600, 112
      %v630 = vpop.permute.xlu0 %629
      %631 = vrot.lane.b32.xlu0 %v608, 112
      %v632 = vpop.permute.xlu0 %631
      %v633 = vsel %vm436, %v628, %v630
      %v634 = vsel %vm436, %v630, %v632
      %637 = vrot.lane.b32.xlu0 %v633, 1
      %v638 = vpop.permute.xlu0 %637
      %639 = vrot.lane.b32.xlu0 %v634, 1
      %v640 = vpop.permute.xlu0 %639
      %v641 = vsel %vm410, %v638, %v640
      %v642 = vsel %vm410, %v640, %v638
      %643 = vrot.lane.b32.xlu0 %v633, 127
      %v644 = vpop.permute.xlu0 %643
      %645 = vrot.lane.b32.xlu0 %v634, 127
      %v646 = vpop.permute.xlu0 %645
      %v647 = vsel %vm417, %v644, %v646
      %v648 = vsel %vm417, %v646, %v644
      %v649 = vsel %vm420, %v647, %v642
      %v650 = vsel %vm421, %v648, %v641
      %v651 = vsel %vm424, %v642, %v647
      %v652 = vsel %vm425, %v641, %v648
      %653 = vrot.lane.b32.xlu0 %v607, 96
      %v654 = vpop.permute.xlu0 %653
      %655 = vrot.lane.b32.xlu0 %v600, 96
      %v656 = vpop.permute.xlu0 %655
      %657 = vrot.lane.b32.xlu0 %v608, 96
      %v658 = vpop.permute.xlu0 %657
      %v659 = vsel %vm463, %v654, %v656
      %v660 = vsel %vm463, %v656, %v658
      %663 = vrot.lane.b32.xlu0 %v659, 1
      %v664 = vpop.permute.xlu0 %663
      %665 = vrot.lane.b32.xlu0 %v660, 1
      %v666 = vpop.permute.xlu0 %665
      %v667 = vsel %vm410, %v664, %v666
      %v668 = vsel %vm410, %v666, %v664
      %669 = vrot.lane.b32.xlu0 %v659, 127
      %v670 = vpop.permute.xlu0 %669
      %671 = vrot.lane.b32.xlu0 %v660, 127
      %v672 = vpop.permute.xlu0 %671
      %v673 = vsel %vm417, %v670, %v672
      %v674 = vsel %vm417, %v672, %v670
      %v675 = vsel %vm420, %v673, %v668
      %v676 = vsel %vm421, %v674, %v667
      %v677 = vsel %vm424, %v668, %v673
      %v678 = vsel %vm425, %v667, %v674
      %679 = vst [vmem:[#allocation2] sm:$0xff] %v621
      %680 = vst [vmem:[#allocation2 + $0x8] sm:$0xff] %v622
      %681 = vst [vmem:[#allocation2 + $0x10] sm:$0xff] %v607
      %682 = vst [vmem:[#allocation2 + $0x18] sm:$0xff] %v600
      %683 = vst [vmem:[#allocation2 + $0x20] sm:$0xff] %v623
      %684 = vst [vmem:[#allocation2 + $0x28] sm:$0xff] %v624
      %685 = vst [vmem:[#allocation2 + $0x30] sm:$0xff] %v649
      %686 = vst [vmem:[#allocation2 + $0x38] sm:$0xff] %v650
      %687 = vst [vmem:[#allocation2 + $0x40] sm:$0xff] %v633
      %688 = vst [vmem:[#allocation2 + $0x48] sm:$0xff] %v634
      %689 = vst [vmem:[#allocation2 + $0x50] sm:$0xff] %v651
      %690 = vst [vmem:[#allocation2 + $0x58] sm:$0xff] %v652
      %691 = vst [vmem:[#allocation2 + $0x60] sm:$0xff] %v675
      %692 = vst [vmem:[#allocation2 + $0x68] sm:$0xff] %v676
      %693 = vst [vmem:[#allocation2 + $0x70] sm:$0xff] %v659
      %694 = vst [vmem:[#allocation2 + $0x78] sm:$0xff] %v660
      %695 = vst [vmem:[#allocation2 + $0x80] sm:$0xff] %v677
      %696 = vst [vmem:[#allocation2 + $0x88] sm:$0xff] %v678
      %v697 = vld [vmem:[#allocation2] sm:$0xff]
      %v698 = vld [vmem:[#allocation2 + $0x8] sm:$0xff]
      %v699 = vld [vmem:[#allocation2 + $0x10] sm:$0xff]
      %v700 = vld [vmem:[#allocation2 + $0x18] sm:$0xff]
      %v701 = vld [vmem:[#allocation2 + $0x20] sm:$0xff]
      %v702 = vld [vmem:[#allocation2 + $0x28] sm:$0xff]
      %v703 = vld [vmem:[#allocation2 + $0x30] sm:$0xff]
      %v704 = vld [vmem:[#allocation2 + $0x38] sm:$0xff]
      %v705 = vld [vmem:[#allocation2 + $0x40] sm:$0xff]
      %v706 = vld [vmem:[#allocation2 + $0x48] sm:$0xff]
      %v707 = vld [vmem:[#allocation2 + $0x50] sm:$0xff]
      %v708 = vld [vmem:[#allocation2 + $0x58] sm:$0xff]
      %v709 = vld [vmem:[#allocation2 + $0x60] sm:$0xff]
      %v710 = vld [vmem:[#allocation2 + $0x68] sm:$0xff]
      %v711 = vld [vmem:[#allocation2 + $0x70] sm:$0xff]
      %v712 = vld [vmem:[#allocation2 + $0x78] sm:$0xff]
      %v713 = vld [vmem:[#allocation2 + $0x80] sm:$0xff]
      %v714 = vld [vmem:[#allocation2 + $0x88] sm:$0xff]
      %v715 = vpack.c.bf16 %v699, %v697
      %v716 = vpack.c.bf16 %v700, %v698
      %v717 = vpack.c.bf16 %v703, %v701
      %v718 = vpack.c.bf16 %v704, %v702
      %v719 = vpack.c.bf16 %v707, %v705
      %v720 = vpack.c.bf16 %v708, %v706
      %v721 = vpack.c.bf16 %v711, %v709
      %v722 = vpack.c.bf16 %v712, %v710
      %v723 = vpack.c.bf16 %v713, %v713
      %v724 = vpack.c.bf16 %v714, %v714
      %726 = vset.pattern.permute.xlu0 0
      %727 = vperm.xlu0 %726, %v590
      %v728 = vpop.permute.xlu0 %727
      %v731 = vsel %vm537, %v589, 0
      %v734 = vsel %vm541, %v723, 0
      %v737 = vsel %vm541, %v724, 0
      %739 = vmatprep.subr.bf16.mxu0 %v716
      %740 = vmatpush1.bf16.msra.mxu0 %v715
      %741 = vmatprep.subr.bf16.mxu0 %v718
      %742 = vmatpush1.bf16.msra.mxu0 %v717
      %743 = vmatprep.subr.bf16.mxu0 %v720
      %744 = vmatpush1.bf16.msra.mxu0 %v719
      %745 = vmatprep.subr.bf16.mxu0 %v722
      %746 = vmatpush1.bf16.msra.mxu0 %v721
      %747 = vmatprep.subr.bf16.mxu0 %v737
      %748 = vmatpush1.bf16.msra.mxu0 %v734
      %749 = vmatprep.subr.bf16.mxu0 0
      %750 = vmatpush1.bf16.msra.mxu0 0
      %751 = vmatprep.subr.bf16.mxu0 0
      %752 = vmatpush1.bf16.msra.mxu0 0
      %753 = vmatprep.subr.bf16.mxu0 0
      %754 = vmatpush1.bf16.msra.mxu0 0
      %755 = vmatprep.subr.bf16.mxu0 0
      %756 = vmatpush1.bf16.msra.mxu0 0
      %757 = vmatprep.subr.bf16.mxu0 0
      %758 = vmatpush1.bf16.msra.mxu0 0
      %759 = vmatprep.subr.bf16.mxu0 0
      %760 = vmatpush1.bf16.msra.mxu0 0
      %761 = vmatprep.subr.bf16.mxu0 0
      %762 = vmatpush1.bf16.msra.mxu0 0
      %763 = vmatprep.subr.bf16.mxu0 0
      %764 = vmatpush1.bf16.msra.mxu0 0
      %765 = vmatprep.subr.bf16.mxu0 0
      %766 = vmatpush1.bf16.msra.mxu0 0
      %767 = vmatprep.subr.bf16.mxu0 0
      %768 = vmatpush1.bf16.msra.mxu0 0
      %769 = vmatprep.subr.bf16.mxu0 0
      %770 = vmatpush1.bf16.msra.mxu0 0
      %771 = vmatprep.mubr.bf16.mxu0 0
      %772 = vmatmul.mubr.bf16.gmra.mrb[0].mxu0 %v731
      %v773 = vpop.f32.mrb[0].mxu0
      %v774 = vadd.f32 %v728, %v773
      %v775 = vpop.f32.mrb[0].mxu0
      %v776 = vadd.f32 %v728, %v775
      %v777 = vpop.f32.mrb[0].mxu0
      %v778 = vpop.f32.mrb[0].mxu0
      %779 = vdwg.mxu0
      %v780 = vmax.f32 %v774, 0.0
      %v781 = vmax.f32 %v776, 0.0
      %v782 = vld [vmem:[%s5] sm:$0x3]
      %v783 = vld [vmem:[%s6] sm:$0xf]
      %785 = vrot.lane.b32.xlu0 %v780, 112
      %v786 = vpop.permute.xlu0 %785
      %789 = vrot.lane.b32.xlu0 %v780, 16
      %v790 = vpop.permute.xlu0 %789
      %791 = vrot.lane.b32.xlu0 %v781, 16
      %v792 = vpop.permute.xlu0 %791
      %v793 = vsel %vm369, %v790, %v792
      %797 = vrot.lane.b32.xlu0 %v781, 48
      %v798 = vpop.permute.xlu0 %797
      %v800 = vsel %vm369, %v786, %v790
      %v801 = vsel %vm369, %v792, %v798
      %802 = vrot.lane.b32.xlu0 %v800, 1
      %v803 = vpop.permute.xlu0 %802
      %804 = vrot.lane.b32.xlu0 %v793, 1
      %v805 = vpop.permute.xlu0 %804
      %v806 = vsel %vm410, %v803, %v805
      %v807 = vsel %vm410, %v805, %v803
      %808 = vrot.lane.b32.xlu0 %v800, 127
      %v809 = vpop.permute.xlu0 %808
      %810 = vrot.lane.b32.xlu0 %v793, 127
      %v811 = vpop.permute.xlu0 %810
      %v812 = vsel %vm417, %v809, %v811
      %v813 = vsel %vm417, %v811, %v809
      %v814 = vsel %vm420, %v812, %v807
      %v815 = vsel %vm421, %v813, %v806
      %v816 = vsel %vm424, %v807, %v812
      %v817 = vsel %vm425, %v806, %v813
      %820 = vrot.lane.b32.xlu0 %v800, 112
      %v821 = vpop.permute.xlu0 %820
      %822 = vrot.lane.b32.xlu0 %v793, 112
      %v823 = vpop.permute.xlu0 %822
      %824 = vrot.lane.b32.xlu0 %v801, 112
      %v825 = vpop.permute.xlu0 %824
      %v826 = vsel %vm436, %v821, %v823
      %v827 = vsel %vm436, %v823, %v825
      %830 = vrot.lane.b32.xlu0 %v826, 1
      %v831 = vpop.permute.xlu0 %830
      %832 = vrot.lane.b32.xlu0 %v827, 1
      %v833 = vpop.permute.xlu0 %832
      %v834 = vsel %vm410, %v831, %v833
      %v835 = vsel %vm410, %v833, %v831
      %836 = vrot.lane.b32.xlu0 %v826, 127
      %v837 = vpop.permute.xlu0 %836
      %838 = vrot.lane.b32.xlu0 %v827, 127
      %v839 = vpop.permute.xlu0 %838
      %v840 = vsel %vm417, %v837, %v839
      %v841 = vsel %vm417, %v839, %v837
      %v842 = vsel %vm420, %v840, %v835
      %v843 = vsel %vm421, %v841, %v834
      %v844 = vsel %vm424, %v835, %v840
      %v845 = vsel %vm425, %v834, %v841
      %846 = vrot.lane.b32.xlu0 %v800, 96
      %v847 = vpop.permute.xlu0 %846
      %848 = vrot.lane.b32.xlu0 %v793, 96
      %v849 = vpop.permute.xlu0 %848
      %850 = vrot.lane.b32.xlu0 %v801, 96
      %v851 = vpop.permute.xlu0 %850
      %v852 = vsel %vm463, %v847, %v849
      %v853 = vsel %vm463, %v849, %v851
      %856 = vrot.lane.b32.xlu0 %v852, 1
      %v857 = vpop.permute.xlu0 %856
      %858 = vrot.lane.b32.xlu0 %v853, 1
      %v859 = vpop.permute.xlu0 %858
      %v860 = vsel %vm410, %v857, %v859
      %v861 = vsel %vm410, %v859, %v857
      %862 = vrot.lane.b32.xlu0 %v852, 127
      %v863 = vpop.permute.xlu0 %862
      %864 = vrot.lane.b32.xlu0 %v853, 127
      %v865 = vpop.permute.xlu0 %864
      %v866 = vsel %vm417, %v863, %v865
      %v867 = vsel %vm417, %v865, %v863
      %v868 = vsel %vm420, %v866, %v861
      %v869 = vsel %vm421, %v867, %v860
      %v870 = vsel %vm424, %v861, %v866
      %v871 = vsel %vm425, %v860, %v867
      %872 = vst [vmem:[#allocation2] sm:$0xff] %v814
      %873 = vst [vmem:[#allocation2 + $0x8] sm:$0xff] %v815
      %874 = vst [vmem:[#allocation2 + $0x10] sm:$0xff] %v800
      %875 = vst [vmem:[#allocation2 + $0x18] sm:$0xff] %v793
      %876 = vst [vmem:[#allocation2 + $0x20] sm:$0xff] %v816
      %877 = vst [vmem:[#allocation2 + $0x28] sm:$0xff] %v817
      %878 = vst [vmem:[#allocation2 + $0x30] sm:$0xff] %v842
      %879 = vst [vmem:[#allocation2 + $0x38] sm:$0xff] %v843
      %880 = vst [vmem:[#allocation2 + $0x40] sm:$0xff] %v826
      %881 = vst [vmem:[#allocation2 + $0x48] sm:$0xff] %v827
      %882 = vst [vmem:[#allocation2 + $0x50] sm:$0xff] %v844
      %883 = vst [vmem:[#allocation2 + $0x58] sm:$0xff] %v845
      %884 = vst [vmem:[#allocation2 + $0x60] sm:$0xff] %v868
      %885 = vst [vmem:[#allocation2 + $0x68] sm:$0xff] %v869
      %886 = vst [vmem:[#allocation2 + $0x70] sm:$0xff] %v852
      %887 = vst [vmem:[#allocation2 + $0x78] sm:$0xff] %v853
      %888 = vst [vmem:[#allocation2 + $0x80] sm:$0xff] %v870
      %889 = vst [vmem:[#allocation2 + $0x88] sm:$0xff] %v871
      %v890 = vld [vmem:[#allocation2] sm:$0xff]
      %v891 = vld [vmem:[#allocation2 + $0x8] sm:$0xff]
      %v892 = vld [vmem:[#allocation2 + $0x10] sm:$0xff]
      %v893 = vld [vmem:[#allocation2 + $0x18] sm:$0xff]
      %v894 = vld [vmem:[#allocation2 + $0x20] sm:$0xff]
      %v895 = vld [vmem:[#allocation2 + $0x28] sm:$0xff]
      %v896 = vld [vmem:[#allocation2 + $0x30] sm:$0xff]
      %v897 = vld [vmem:[#allocation2 + $0x38] sm:$0xff]
      %v898 = vld [vmem:[#allocation2 + $0x40] sm:$0xff]
      %v899 = vld [vmem:[#allocation2 + $0x48] sm:$0xff]
      %v900 = vld [vmem:[#allocation2 + $0x50] sm:$0xff]
      %v901 = vld [vmem:[#allocation2 + $0x58] sm:$0xff]
      %v902 = vld [vmem:[#allocation2 + $0x60] sm:$0xff]
      %v903 = vld [vmem:[#allocation2 + $0x68] sm:$0xff]
      %v904 = vld [vmem:[#allocation2 + $0x70] sm:$0xff]
      %v905 = vld [vmem:[#allocation2 + $0x78] sm:$0xff]
      %v906 = vld [vmem:[#allocation2 + $0x80] sm:$0xff]
      %v907 = vld [vmem:[#allocation2 + $0x88] sm:$0xff]
      %v908 = vpack.c.bf16 %v892, %v890
      %v909 = vpack.c.bf16 %v893, %v891
      %v910 = vpack.c.bf16 %v896, %v894
      %v911 = vpack.c.bf16 %v897, %v895
      %v912 = vpack.c.bf16 %v900, %v898
      %v913 = vpack.c.bf16 %v901, %v899
      %v914 = vpack.c.bf16 %v904, %v902
      %v915 = vpack.c.bf16 %v905, %v903
      %v916 = vpack.c.bf16 %v906, %v906
      %v917 = vpack.c.bf16 %v907, %v907
      %919 = vset.pattern.permute.xlu0 0
      %920 = vperm.xlu0 %919, %v783
      %v921 = vpop.permute.xlu0 %920
      %v924 = vsel %vm537, %v782, 0
      %v927 = vsel %vm541, %v916, 0
      %v930 = vsel %vm541, %v917, 0
      %932 = vmatprep.subr.bf16.mxu0 %v909
      %933 = vmatpush1.bf16.msra.mxu0 %v908
      %934 = vmatprep.subr.bf16.mxu0 %v911
      %935 = vmatpush1.bf16.msra.mxu0 %v910
      %936 = vmatprep.subr.bf16.mxu0 %v913
      %937 = vmatpush1.bf16.msra.mxu0 %v912
      %938 = vmatprep.subr.bf16.mxu0 %v915
      %939 = vmatpush1.bf16.msra.mxu0 %v914
      %940 = vmatprep.subr.bf16.mxu0 %v930
      %941 = vmatpush1.bf16.msra.mxu0 %v927
      %942 = vmatprep.subr.bf16.mxu0 0
      %943 = vmatpush1.bf16.msra.mxu0 0
      %944 = vmatprep.subr.bf16.mxu0 0
      %945 = vmatpush1.bf16.msra.mxu0 0
      %946 = vmatprep.subr.bf16.mxu0 0
      %947 = vmatpush1.bf16.msra.mxu0 0
      %948 = vmatprep.subr.bf16.mxu0 0
      %949 = vmatpush1.bf16.msra.mxu0 0
      %950 = vmatprep.subr.bf16.mxu0 0
      %951 = vmatpush1.bf16.msra.mxu0 0
      %952 = vmatprep.subr.bf16.mxu0 0
      %953 = vmatpush1.bf16.msra.mxu0 0
      %954 = vmatprep.subr.bf16.mxu0 0
      %955 = vmatpush1.bf16.msra.mxu0 0
      %956 = vmatprep.subr.bf16.mxu0 0
      %957 = vmatpush1.bf16.msra.mxu0 0
      %958 = vmatprep.subr.bf16.mxu0 0
      %959 = vmatpush1.bf16.msra.mxu0 0
      %960 = vmatprep.subr.bf16.mxu0 0
      %961 = vmatpush1.bf16.msra.mxu0 0
      %962 = vmatprep.subr.bf16.mxu0 0
      %963 = vmatpush1.bf16.msra.mxu0 0
      %964 = vmatprep.mubr.bf16.mxu0 0
      %965 = vmatmul.mubr.bf16.gmra.mrb[0].mxu0 %v924
      %v966 = vpop.f32.mrb[0].mxu0
      %v967 = vadd.f32 %v921, %v966
      %v968 = vpop.f32.mrb[0].mxu0
      %v969 = vadd.f32 %v921, %v968
      %v970 = vpop.f32.mrb[0].mxu0
      %v971 = vpop.f32.mrb[0].mxu0
      %972 = vdwg.mxu0
      %v973 = vmax.f32 %v967, 0.0
      %v974 = vmax.f32 %v969, 0.0
      %v975 = vld [vmem:[%s7] sm:$0xff]
      %v976 = vld [vmem:[%s7 + $0x8] sm:$0xff]
      %v977 = vld [vmem:[%s7 + $0x10] sm:$0xff]
      %v978 = vld [vmem:[%s7 + $0x18] sm:$0xff]
      %v979 = vld [vmem:[%s7 + $0x20] sm:$0xff]
      %v980 = vld [vmem:[%s7 + $0x28] sm:$0xff]
      %v981 = vld [vmem:[%s7 + $0x30] sm:$0xff]
      %v982 = vld [vmem:[%s7 + $0x38] sm:$0xff]
      %v983 = vld [vmem:[%s7 + $0x40] sm:$0xff]
      %v984 = vld [vmem:[%s7 + $0x48] sm:$0xff]
      %v985 = vld [vmem:[%s7 + $0x50] sm:$0xff]
      %v986 = vld [vmem:[%s7 + $0x58] sm:$0xff]
      %v987 = vld [vmem:[%s7 + $0x60] sm:$0xff]
      %v988 = vld [vmem:[%s7 + $0x68] sm:$0xff]
      %v989 = vld [vmem:[%s7 + $0x70] sm:$0xff]
      %v990 = vld [vmem:[%s7 + $0x78] sm:$0xff]
      %v991 = vld [vmem:[%s7 + $0x80] sm:$0xff]
      %v992 = vld [vmem:[%s7 + $0x88] sm:$0xff]
      %v993 = vld [vmem:[%s7 + $0x90] sm:$0xff]
      %v994 = vld [vmem:[%s7 + $0x98] sm:$0xff]
      %v995 = vld [vmem:[%s7 + $0xa0] sm:$0xff]
      %v996 = vld [vmem:[%s7 + $0xa8] sm:$0xff]
      %v997 = vld [vmem:[%s7 + $0xb0] sm:$0xff]
      %v998 = vld [vmem:[%s7 + $0xb8] sm:$0xff]
      %v999 = vld [vmem:[%s7 + $0xc0] sm:$0xff]
      %v1000 = vld [vmem:[%s7 + $0xc8] sm:$0xff]
      %v1001 = vld [vmem:[%s7 + $0xd0] sm:$0xff]
      %v1002 = vld [vmem:[%s7 + $0xd8] sm:$0xff]
      %v1003 = vld [vmem:[%s7 + $0xe0] sm:$0xff]
      %v1004 = vld [vmem:[%s7 + $0xe8] sm:$0xff]
      %v1005 = vld [vmem:[%s7 + $0xf0] sm:$0xff]
      %v1006 = vld [vmem:[%s7 + $0xf8] sm:$0xff]
      %v1007 = vld [vmem:[%s7 + $0x100] sm:$0xff]
      %v1008 = vld [vmem:[%s7 + $0x108] sm:$0xff]
      %v1009 = vld [vmem:[%s7 + $0x110] sm:$0xff]
      %v1010 = vld [vmem:[%s7 + $0x118] sm:$0xff]
      %v1011 = vld [vmem:[%s7 + $0x120] sm:$0xff]
      %v1012 = vld [vmem:[%s7 + $0x128] sm:$0xff]
      %v1013 = vld [vmem:[%s7 + $0x130] sm:$0xff]
      %v1014 = vld [vmem:[%s7 + $0x138] sm:$0xff]
      %v1015 = vld [vmem:[%s7 + $0x140] sm:$0xff]
      %v1016 = vld [vmem:[%s7 + $0x148] sm:$0xff]
      %v1017 = vld [vmem:[%s7 + $0x150] sm:$0xff]
      %v1018 = vld [vmem:[%s7 + $0x158] sm:$0xff]
      %v1019 = vld [vmem:[%s7 + $0x160] sm:$0xff]
      %v1020 = vld [vmem:[%s7 + $0x168] sm:$0xff]
      %v1021 = vld [vmem:[%s7 + $0x170] sm:$0xff]
      %v1022 = vld [vmem:[%s7 + $0x178] sm:$0xff]
      %v1023 = vld [vmem:[%s7 + $0x180] sm:$0xff]
      %v1024 = vld [vmem:[%s7 + $0x188] sm:$0xff]
      %v1025 = vld [vmem:[%s7 + $0x190] sm:$0xff]
      %v1026 = vld [vmem:[%s7 + $0x198] sm:$0xff]
      %v1027 = vld [vmem:[%s7 + $0x1a0] sm:$0xff]
      %v1028 = vld [vmem:[%s7 + $0x1a8] sm:$0xff]
      %v1029 = vld [vmem:[%s7 + $0x1b0] sm:$0xff]
      %v1030 = vld [vmem:[%s7 + $0x1b8] sm:$0xff]
      %v1031 = vld [vmem:[%s7 + $0x1c0] sm:$0xff]
      %v1032 = vld [vmem:[%s7 + $0x1c8] sm:$0xff]
      %v1033 = vld [vmem:[%s7 + $0x1d0] sm:$0xff]
      %v1034 = vld [vmem:[%s7 + $0x1d8] sm:$0xff]
      %v1035 = vld [vmem:[%s7 + $0x1e0] sm:$0xff]
      %v1036 = vld [vmem:[%s7 + $0x1e8] sm:$0xff]
      %v1037 = vld [vmem:[%s7 + $0x1f0] sm:$0xff]
      %v1038 = vld [vmem:[%s7 + $0x1f8] sm:$0xff]
      %v1039 = vld [vmem:[%s7 + $0x200] sm:$0xff]
      %v1040 = vld [vmem:[%s7 + $0x208] sm:$0xff]
      %v1041 = vld [vmem:[%s7 + $0x210] sm:$0xff]
      %v1042 = vld [vmem:[%s7 + $0x218] sm:$0xff]
      %v1043 = vld [vmem:[%s7 + $0x220] sm:$0xff]
      %v1044 = vld [vmem:[%s7 + $0x228] sm:$0xff]
      %v1045 = vld [vmem:[%s7 + $0x230] sm:$0xff]
      %v1046 = vld [vmem:[%s7 + $0x238] sm:$0xff]
      %v1047 = vld [vmem:[%s7 + $0x240] sm:$0xff]
      %v1048 = vld [vmem:[%s7 + $0x248] sm:$0xff]
      %v1049 = vld [vmem:[%s7 + $0x250] sm:$0xff]
      %v1050 = vld [vmem:[%s7 + $0x258] sm:$0xff]
      %v1051 = vld [vmem:[%s7 + $0x260] sm:$0xff]
      %v1052 = vld [vmem:[%s7 + $0x268] sm:$0xff]
      %v1053 = vld [vmem:[%s7 + $0x270] sm:$0xff]
      %v1054 = vld [vmem:[%s7 + $0x278] sm:$0xff]
      %v1055 = vld [vmem:[%s7 + $0x280] sm:$0xff]
      %v1056 = vld [vmem:[%s7 + $0x288] sm:$0xff]
      %v1057 = vld [vmem:[%s7 + $0x290] sm:$0xff]
      %v1058 = vld [vmem:[%s7 + $0x298] sm:$0xff]
      %v1059 = vld [vmem:[%s7 + $0x2a0] sm:$0xff]
      %v1060 = vld [vmem:[%s7 + $0x2a8] sm:$0xff]
      %v1061 = vld [vmem:[%s7 + $0x2b0] sm:$0xff]
      %v1062 = vld [vmem:[%s7 + $0x2b8] sm:$0xff]
      %v1063 = vld [vmem:[%s7 + $0x2c0] sm:$0xff]
      %v1064 = vld [vmem:[%s7 + $0x2c8] sm:$0xff]
      %v1065 = vld [vmem:[%s7 + $0x2d0] sm:$0xff]
      %v1066 = vld [vmem:[%s7 + $0x2d8] sm:$0xff]
      %v1067 = vld [vmem:[%s7 + $0x2e0] sm:$0xff]
      %v1068 = vld [vmem:[%s7 + $0x2e8] sm:$0xff]
      %v1069 = vld [vmem:[%s7 + $0x2f0] sm:$0xff]
      %v1070 = vld [vmem:[%s7 + $0x2f8] sm:$0xff]
      %v1071 = vld [vmem:[%s7 + $0x300] sm:$0xff]
      %v1072 = vld [vmem:[%s7 + $0x308] sm:$0xff]
      %v1073 = vld [vmem:[%s7 + $0x310] sm:$0xff]
      %v1074 = vld [vmem:[%s7 + $0x318] sm:$0xff]
      %v1075 = vld [vmem:[%s7 + $0x320] sm:$0xff]
      %v1076 = vld [vmem:[%s7 + $0x328] sm:$0xff]
      %v1077 = vld [vmem:[%s7 + $0x330] sm:$0xff]
      %v1078 = vld [vmem:[%s7 + $0x338] sm:$0xff]
      %v1079 = vld [vmem:[%s7 + $0x340] sm:$0xff]
      %v1080 = vld [vmem:[%s7 + $0x348] sm:$0xff]
      %v1081 = vld [vmem:[%s7 + $0x350] sm:$0xff]
      %v1082 = vld [vmem:[%s7 + $0x358] sm:$0xff]
      %v1083 = vld [vmem:[%s7 + $0x360] sm:$0xff]
      %v1084 = vld [vmem:[%s7 + $0x368] sm:$0xff]
      %v1085 = vld [vmem:[%s7 + $0x370] sm:$0xff]
      %v1086 = vld [vmem:[%s7 + $0x378] sm:$0xff]
      %v1087 = vld [vmem:[%s7 + $0x380] sm:$0xff]
      %v1088 = vld [vmem:[%s7 + $0x388] sm:$0xff]
      %v1089 = vld [vmem:[%s7 + $0x390] sm:$0xff]
      %v1090 = vld [vmem:[%s7 + $0x398] sm:$0xff]
      %v1091 = vld [vmem:[%s7 + $0x3a0] sm:$0xff]
      %v1092 = vld [vmem:[%s7 + $0x3a8] sm:$0xff]
      %v1093 = vld [vmem:[%s7 + $0x3b0] sm:$0xff]
      %v1094 = vld [vmem:[%s7 + $0x3b8] sm:$0xff]
      %v1095 = vld [vmem:[%s7 + $0x3c0] sm:$0xff]
      %v1096 = vld [vmem:[%s7 + $0x3c8] sm:$0xff]
      %v1097 = vld [vmem:[%s7 + $0x3d0] sm:$0xff]
      %v1098 = vld [vmem:[%s7 + $0x3d8] sm:$0xff]
      %v1099 = vld [vmem:[%s7 + $0x3e0] sm:$0xff]
      %v1100 = vld [vmem:[%s7 + $0x3e8] sm:$0xff]
      %v1101 = vld [vmem:[%s7 + $0x3f0] sm:$0xff]
      %v1102 = vld [vmem:[%s7 + $0x3f8] sm:$0xff]
      %v1103 = vld [vmem:[%s7 + $0x400] sm:$0xff]
      %v1104 = vld [vmem:[%s7 + $0x408] sm:$0xff]
      %v1105 = vld [vmem:[%s7 + $0x410] sm:$0xff]
      %v1106 = vld [vmem:[%s7 + $0x418] sm:$0xff]
      %v1107 = vld [vmem:[%s7 + $0x420] sm:$0xff]
      %v1108 = vld [vmem:[%s7 + $0x428] sm:$0xff]
      %v1109 = vld [vmem:[%s7 + $0x430] sm:$0xff]
      %v1110 = vld [vmem:[%s7 + $0x438] sm:$0xff]
      %v1111 = vld [vmem:[%s7 + $0x440] sm:$0xff]
      %v1112 = vld [vmem:[%s7 + $0x448] sm:$0xff]
      %v1113 = vld [vmem:[%s7 + $0x450] sm:$0xff]
      %v1114 = vld [vmem:[%s7 + $0x458] sm:$0xff]
      %v1115 = vld [vmem:[%s7 + $0x460] sm:$0xff]
      %v1116 = vld [vmem:[%s7 + $0x468] sm:$0xff]
      %v1117 = vld [vmem:[%s7 + $0x470] sm:$0xff]
      %v1118 = vld [vmem:[%s7 + $0x478] sm:$0xff]
      %v1119 = vld [vmem:[%s7 + $0x480] sm:$0xff]
      %v1120 = vld [vmem:[%s7 + $0x488] sm:$0xff]
      %v1121 = vld [vmem:[%s7 + $0x490] sm:$0xff]
      %v1122 = vld [vmem:[%s7 + $0x498] sm:$0xff]
      %v1123 = vld [vmem:[%s7 + $0x4a0] sm:$0xff]
      %v1124 = vld [vmem:[%s7 + $0x4a8] sm:$0xff]
      %v1125 = vld [vmem:[%s7 + $0x4b0] sm:$0xff]
      %v1126 = vld [vmem:[%s7 + $0x4b8] sm:$0xff]
      %v1127 = vld [vmem:[%s7 + $0x4c0] sm:$0xff]
      %v1128 = vld [vmem:[%s7 + $0x4c8] sm:$0xff]
      %v1129 = vld [vmem:[%s7 + $0x4d0] sm:$0xff]
      %v1130 = vld [vmem:[%s7 + $0x4d8] sm:$0xff]
      %v1131 = vld [vmem:[%s7 + $0x4e0] sm:$0xff]
      %v1132 = vld [vmem:[%s7 + $0x4e8] sm:$0xff]
      %v1133 = vld [vmem:[%s7 + $0x4f0] sm:$0xff]
      %v1134 = vld [vmem:[%s7 + $0x4f8] sm:$0xff]
      %v1135 = vld [vmem:[%s7 + $0x500] sm:$0xff]
      %v1136 = vld [vmem:[%s7 + $0x508] sm:$0xff]
      %v1137 = vld [vmem:[%s7 + $0x510] sm:$0xff]
      %v1138 = vld [vmem:[%s7 + $0x518] sm:$0xff]
      %v1139 = vld [vmem:[%s7 + $0x520] sm:$0xff]
      %v1140 = vld [vmem:[%s7 + $0x528] sm:$0xff]
      %v1141 = vld [vmem:[%s7 + $0x530] sm:$0xff]
      %v1142 = vld [vmem:[%s7 + $0x538] sm:$0xff]
      %v1143 = vld [vmem:[%s7 + $0x540] sm:$0xff]
      %v1144 = vld [vmem:[%s7 + $0x548] sm:$0xff]
      %v1145 = vld [vmem:[%s7 + $0x550] sm:$0xff]
      %v1146 = vld [vmem:[%s7 + $0x558] sm:$0xff]
      %v1147 = vld [vmem:[%s7 + $0x560] sm:$0xff]
      %v1148 = vld [vmem:[%s7 + $0x568] sm:$0xff]
      %v1149 = vld [vmem:[%s7 + $0x570] sm:$0xff]
      %v1150 = vld [vmem:[%s7 + $0x578] sm:$0xff]
      %v1151 = vld [vmem:[%s7 + $0x580] sm:$0xff]
      %v1152 = vld [vmem:[%s7 + $0x588] sm:$0xff]
      %v1153 = vld [vmem:[%s7 + $0x590] sm:$0xff]
      %v1154 = vld [vmem:[%s7 + $0x598] sm:$0xff]
      %v1155 = vld [vmem:[%s7 + $0x5a0] sm:$0xff]
      %v1156 = vld [vmem:[%s7 + $0x5a8] sm:$0xff]
      %v1157 = vld [vmem:[%s7 + $0x5b0] sm:$0xff]
      %v1158 = vld [vmem:[%s7 + $0x5b8] sm:$0xff]
      %v1159 = vld [vmem:[%s7 + $0x5c0] sm:$0xff]
      %v1160 = vld [vmem:[%s7 + $0x5c8] sm:$0xff]
      %v1161 = vld [vmem:[%s7 + $0x5d0] sm:$0xff]
      %v1162 = vld [vmem:[%s7 + $0x5d8] sm:$0xff]
      %v1163 = vld [vmem:[%s7 + $0x5e0] sm:$0xff]
      %v1164 = vld [vmem:[%s7 + $0x5e8] sm:$0xff]
      %v1165 = vld [vmem:[%s7 + $0x5f0] sm:$0xff]
      %v1166 = vld [vmem:[%s7 + $0x5f8] sm:$0xff]
      %v1167 = vld [vmem:[%s7 + $0x600] sm:$0xff]
      %v1168 = vld [vmem:[%s7 + $0x608] sm:$0xff]
      %v1169 = vld [vmem:[%s7 + $0x610] sm:$0xff]
      %v1170 = vld [vmem:[%s7 + $0x618] sm:$0xff]
      %v1171 = vld [vmem:[%s7 + $0x620] sm:$0xff]
      %v1172 = vld [vmem:[%s7 + $0x628] sm:$0xff]
      %v1173 = vld [vmem:[%s7 + $0x630] sm:$0xff]
      %v1174 = vld [vmem:[%s7 + $0x638] sm:$0xff]
      %v1175 = vld [vmem:[%s7 + $0x640] sm:$0xff]
      %v1176 = vld [vmem:[%s7 + $0x648] sm:$0xff]
      %v1177 = vld [vmem:[%s7 + $0x650] sm:$0xff]
      %v1178 = vld [vmem:[%s7 + $0x658] sm:$0xff]
      %v1179 = vld [vmem:[%s7 + $0x660] sm:$0xff]
      %v1180 = vld [vmem:[%s7 + $0x668] sm:$0xff]
      %v1181 = vld [vmem:[%s7 + $0x670] sm:$0xff]
      %v1182 = vld [vmem:[%s7 + $0x678] sm:$0xff]
      %v1183 = vld [vmem:[%s7 + $0x680] sm:$0xff]
      %v1184 = vld [vmem:[%s7 + $0x688] sm:$0xff]
      %v1185 = vld [vmem:[%s7 + $0x690] sm:$0xff]
      %v1186 = vld [vmem:[%s7 + $0x698] sm:$0xff]
      %v1187 = vld [vmem:[%s7 + $0x6a0] sm:$0xff]
      %v1188 = vld [vmem:[%s7 + $0x6a8] sm:$0xff]
      %v1189 = vld [vmem:[%s7 + $0x6b0] sm:$0xff]
      %v1190 = vld [vmem:[%s7 + $0x6b8] sm:$0xff]
      %v1191 = vld [vmem:[%s7 + $0x6c0] sm:$0xff]
      %v1192 = vld [vmem:[%s7 + $0x6c8] sm:$0xff]
      %v1193 = vld [vmem:[%s7 + $0x6d0] sm:$0xff]
      %v1194 = vld [vmem:[%s7 + $0x6d8] sm:$0xff]
      %v1195 = vld [vmem:[%s7 + $0x6e0] sm:$0xff]
      %v1196 = vld [vmem:[%s7 + $0x6e8] sm:$0xff]
      %v1197 = vld [vmem:[%s7 + $0x6f0] sm:$0xff]
      %v1198 = vld [vmem:[%s7 + $0x6f8] sm:$0xff]
      %v1199 = vld [vmem:[%s7 + $0x700] sm:$0xff]
      %v1200 = vld [vmem:[%s7 + $0x708] sm:$0xff]
      %v1201 = vld [vmem:[%s7 + $0x710] sm:$0xff]
      %v1202 = vld [vmem:[%s7 + $0x718] sm:$0xff]
      %v1203 = vld [vmem:[%s7 + $0x720] sm:$0xff]
      %v1204 = vld [vmem:[%s7 + $0x728] sm:$0xff]
      %v1205 = vld [vmem:[%s7 + $0x730] sm:$0xff]
      %v1206 = vld [vmem:[%s7 + $0x738] sm:$0xff]
      %v1207 = vld [vmem:[%s7 + $0x740] sm:$0xff]
      %v1208 = vld [vmem:[%s7 + $0x748] sm:$0xff]
      %v1209 = vld [vmem:[%s7 + $0x750] sm:$0xff]
      %v1210 = vld [vmem:[%s7 + $0x758] sm:$0xff]
      %v1211 = vld [vmem:[%s7 + $0x760] sm:$0xff]
      %v1212 = vld [vmem:[%s7 + $0x768] sm:$0xff]
      %v1213 = vld [vmem:[%s7 + $0x770] sm:$0xff]
      %v1214 = vld [vmem:[%s7 + $0x778] sm:$0xff]
      %v1215 = vld [vmem:[%s7 + $0x780] sm:$0xff]
      %v1216 = vld [vmem:[%s7 + $0x788] sm:$0xff]
      %v1217 = vld [vmem:[%s7 + $0x790] sm:$0xff]
      %v1218 = vld [vmem:[%s7 + $0x798] sm:$0xff]
      %v1219 = vld [vmem:[%s7 + $0x7a0] sm:$0xff]
      %v1220 = vld [vmem:[%s7 + $0x7a8] sm:$0xff]
      %v1221 = vld [vmem:[%s7 + $0x7b0] sm:$0xff]
      %v1222 = vld [vmem:[%s7 + $0x7b8] sm:$0xff]
      %v1223 = vld [vmem:[%s7 + $0x7c0] sm:$0xff]
      %v1224 = vld [vmem:[%s7 + $0x7c8] sm:$0xff]
      %v1225 = vld [vmem:[%s7 + $0x7d0] sm:$0xff]
      %v1226 = vld [vmem:[%s7 + $0x7d8] sm:$0xff]
      %v1227 = vld [vmem:[%s7 + $0x7e0] sm:$0xff]
      %v1228 = vld [vmem:[%s7 + $0x7e8] sm:$0xff]
      %v1229 = vld [vmem:[%s7 + $0x7f0] sm:$0xff]
      %v1230 = vld [vmem:[%s7 + $0x7f8] sm:$0xff]
      %1231 = vmatprep.subr.mxu0 %v976
      %1232 = vmatpush1.msra.mxu0 %v975
      %1233 = vmatprep.subr.mxu0 %v984
      %1234 = vmatpush1.msra.mxu0 %v983
      %1235 = vmatprep.subr.mxu0 %v992
      %1236 = vmatpush1.msra.mxu0 %v991
      %1237 = vmatprep.subr.mxu0 %v1000
      %1238 = vmatpush1.msra.mxu0 %v999
      %1239 = vmatprep.subr.mxu0 %v1008
      %1240 = vmatpush1.msra.mxu0 %v1007
      %1241 = vmatprep.subr.mxu0 %v1016
      %1242 = vmatpush1.msra.mxu0 %v1015
      %1243 = vmatprep.subr.mxu0 %v1024
      %1244 = vmatpush1.msra.mxu0 %v1023
      %1245 = vmatprep.subr.mxu0 %v1032
      %1246 = vmatpush1.msra.mxu0 %v1031
      %1247 = vmatprep.subr.mxu0 %v1040
      %1248 = vmatpush1.msra.mxu0 %v1039
      %1249 = vmatprep.subr.mxu0 %v1048
      %1250 = vmatpush1.msra.mxu0 %v1047
      %1251 = vmatprep.subr.mxu0 %v1056
      %1252 = vmatpush1.msra.mxu0 %v1055
      %1253 = vmatprep.subr.mxu0 %v1064
      %1254 = vmatpush1.msra.mxu0 %v1063
      %1255 = vmatprep.subr.mxu0 %v1072
      %1256 = vmatpush1.msra.mxu0 %v1071
      %1257 = vmatprep.subr.mxu0 %v1080
      %1258 = vmatpush1.msra.mxu0 %v1079
      %1259 = vmatprep.subr.mxu0 %v1088
      %1260 = vmatpush1.msra.mxu0 %v1087
      %1261 = vmatprep.subr.mxu0 %v1096
      %1262 = vmatpush1.msra.mxu0 %v1095
      %1263 = vmatprep.subr.mxu0 %v1104
      %1264 = vmatpush1.msra.mxu0 %v1103
      %1265 = vmatprep.subr.mxu0 %v1112
      %1266 = vmatpush1.msra.mxu0 %v1111
      %1267 = vmatprep.subr.mxu0 %v1120
      %1268 = vmatpush1.msra.mxu0 %v1119
      %1269 = vmatprep.subr.mxu0 %v1128
      %1270 = vmatpush1.msra.mxu0 %v1127
      %1271 = vmatprep.subr.mxu0 %v1136
      %1272 = vmatpush1.msra.mxu0 %v1135
      %1273 = vmatprep.subr.mxu0 %v1144
      %1274 = vmatpush1.msra.mxu0 %v1143
      %1275 = vmatprep.subr.mxu0 %v1152
      %1276 = vmatpush1.msra.mxu0 %v1151
      %1277 = vmatprep.subr.mxu0 %v1160
      %1278 = vmatpush1.msra.mxu0 %v1159
      %1279 = vmatprep.subr.mxu0 %v1168
      %1280 = vmatpush1.msra.mxu0 %v1167
      %1281 = vmatprep.subr.mxu0 %v1176
      %1282 = vmatpush1.msra.mxu0 %v1175
      %1283 = vmatprep.subr.mxu0 %v1184
      %1284 = vmatpush1.msra.mxu0 %v1183
      %1285 = vmatprep.subr.mxu0 %v1192
      %1286 = vmatpush1.msra.mxu0 %v1191
      %1287 = vmatprep.subr.mxu0 %v1200
      %1288 = vmatpush1.msra.mxu0 %v1199
      %1289 = vmatprep.subr.mxu0 %v1208
      %1290 = vmatpush1.msra.mxu0 %v1207
      %1291 = vmatprep.subr.mxu0 %v1216
      %1292 = vmatpush1.msra.mxu0 %v1215
      %1293 = vmatprep.subr.mxu0 %v1224
      %1294 = vmatpush1.msra.mxu0 %v1223
      %1295 = vmatprep.mubr.f32.mxu0 %v974
      %1296 = vmatmul.mubr.f32.gmra.mrb[0].mxu0 %v973
      %v1297 = vpop.f32.mrb[0].mxu0
      %v1298 = vadd.f32 0.0, %v1297
      %v1299 = vpop.f32.mrb[0].mxu0
      %v1300 = vadd.f32 0.0, %v1299
      %1301 = vdwg.mxu0
      %1302 = vmatprep.subr.mxu0 %v978
      %1303 = vmatpush1.msra.mxu0 %v977
      %1304 = vmatprep.subr.mxu0 %v986
      %1305 = vmatpush1.msra.mxu0 %v985
      %1306 = vmatprep.subr.mxu0 %v994
      %1307 = vmatpush1.msra.mxu0 %v993
      %1308 = vmatprep.subr.mxu0 %v1002
      %1309 = vmatpush1.msra.mxu0 %v1001
      %1310 = vmatprep.subr.mxu0 %v1010
      %1311 = vmatpush1.msra.mxu0 %v1009
      %1312 = vmatprep.subr.mxu0 %v1018
      %1313 = vmatpush1.msra.mxu0 %v1017
      %1314 = vmatprep.subr.mxu0 %v1026
      %1315 = vmatpush1.msra.mxu0 %v1025
      %1316 = vmatprep.subr.mxu0 %v1034
      %1317 = vmatpush1.msra.mxu0 %v1033
      %1318 = vmatprep.subr.mxu0 %v1042
      %1319 = vmatpush1.msra.mxu0 %v1041
      %1320 = vmatprep.subr.mxu0 %v1050
      %1321 = vmatpush1.msra.mxu0 %v1049
      %1322 = vmatprep.subr.mxu0 %v1058
      %1323 = vmatpush1.msra.mxu0 %v1057
      %1324 = vmatprep.subr.mxu0 %v1066
      %1325 = vmatpush1.msra.mxu0 %v1065
      %1326 = vmatprep.subr.mxu0 %v1074
      %1327 = vmatpush1.msra.mxu0 %v1073
      %1328 = vmatprep.subr.mxu0 %v1082
      %1329 = vmatpush1.msra.mxu0 %v1081
      %1330 = vmatprep.subr.mxu0 %v1090
      %1331 = vmatpush1.msra.mxu0 %v1089
      %1332 = vmatprep.subr.mxu0 %v1098
      %1333 = vmatpush1.msra.mxu0 %v1097
      %1334 = vmatprep.subr.mxu0 %v1106
      %1335 = vmatpush1.msra.mxu0 %v1105
      %1336 = vmatprep.subr.mxu0 %v1114
      %1337 = vmatpush1.msra.mxu0 %v1113
      %1338 = vmatprep.subr.mxu0 %v1122
      %1339 = vmatpush1.msra.mxu0 %v1121
      %1340 = vmatprep.subr.mxu0 %v1130
      %1341 = vmatpush1.msra.mxu0 %v1129
      %1342 = vmatprep.subr.mxu0 %v1138
      %1343 = vmatpush1.msra.mxu0 %v1137
      %1344 = vmatprep.subr.mxu0 %v1146
      %1345 = vmatpush1.msra.mxu0 %v1145
      %1346 = vmatprep.subr.mxu0 %v1154
      %1347 = vmatpush1.msra.mxu0 %v1153
      %1348 = vmatprep.subr.mxu0 %v1162
      %1349 = vmatpush1.msra.mxu0 %v1161
      %1350 = vmatprep.subr.mxu0 %v1170
      %1351 = vmatpush1.msra.mxu0 %v1169
      %1352 = vmatprep.subr.mxu0 %v1178
      %1353 = vmatpush1.msra.mxu0 %v1177
      %1354 = vmatprep.subr.mxu0 %v1186
      %1355 = vmatpush1.msra.mxu0 %v1185
      %1356 = vmatprep.subr.mxu0 %v1194
      %1357 = vmatpush1.msra.mxu0 %v1193
      %1358 = vmatprep.subr.mxu0 %v1202
      %1359 = vmatpush1.msra.mxu0 %v1201
      %1360 = vmatprep.subr.mxu0 %v1210
      %1361 = vmatpush1.msra.mxu0 %v1209
      %1362 = vmatprep.subr.mxu0 %v1218
      %1363 = vmatpush1.msra.mxu0 %v1217
      %1364 = vmatprep.subr.mxu0 %v1226
      %1365 = vmatpush1.msra.mxu0 %v1225
      %1366 = vmatprep.mubr.f32.mxu0 %v974
      %1367 = vmatmul.mubr.f32.gmra.mrb[0].mxu0 %v973
      %v1368 = vpop.f32.mrb[0].mxu0
      %v1369 = vadd.f32 0.0, %v1368
      %v1370 = vpop.f32.mrb[0].mxu0
      %v1371 = vadd.f32 0.0, %v1370
      %1372 = vdwg.mxu0
      %1373 = vmatprep.subr.mxu0 %v980
      %1374 = vmatpush1.msra.mxu0 %v979
      %1375 = vmatprep.subr.mxu0 %v988
      %1376 = vmatpush1.msra.mxu0 %v987
      %1377 = vmatprep.subr.mxu0 %v996
      %1378 = vmatpush1.msra.mxu0 %v995
      %1379 = vmatprep.subr.mxu0 %v1004
      %1380 = vmatpush1.msra.mxu0 %v1003
      %1381 = vmatprep.subr.mxu0 %v1012
      %1382 = vmatpush1.msra.mxu0 %v1011
      %1383 = vmatprep.subr.mxu0 %v1020
      %1384 = vmatpush1.msra.mxu0 %v1019
      %1385 = vmatprep.subr.mxu0 %v1028
      %1386 = vmatpush1.msra.mxu0 %v1027
      %1387 = vmatprep.subr.mxu0 %v1036
      %1388 = vmatpush1.msra.mxu0 %v1035
      %1389 = vmatprep.subr.mxu0 %v1044
      %1390 = vmatpush1.msra.mxu0 %v1043
      %1391 = vmatprep.subr.mxu0 %v1052
      %1392 = vmatpush1.msra.mxu0 %v1051
      %1393 = vmatprep.subr.mxu0 %v1060
      %1394 = vmatpush1.msra.mxu0 %v1059
      %1395 = vmatprep.subr.mxu0 %v1068
      %1396 = vmatpush1.msra.mxu0 %v1067
      %1397 = vmatprep.subr.mxu0 %v1076
      %1398 = vmatpush1.msra.mxu0 %v1075
      %1399 = vmatprep.subr.mxu0 %v1084
      %1400 = vmatpush1.msra.mxu0 %v1083
      %1401 = vmatprep.subr.mxu0 %v1092
      %1402 = vmatpush1.msra.mxu0 %v1091
      %1403 = vmatprep.subr.mxu0 %v1100
      %1404 = vmatpush1.msra.mxu0 %v1099
      %1405 = vmatprep.subr.mxu0 %v1108
      %1406 = vmatpush1.msra.mxu0 %v1107
      %1407 = vmatprep.subr.mxu0 %v1116
      %1408 = vmatpush1.msra.mxu0 %v1115
      %1409 = vmatprep.subr.mxu0 %v1124
      %1410 = vmatpush1.msra.mxu0 %v1123
      %1411 = vmatprep.subr.mxu0 %v1132
      %1412 = vmatpush1.msra.mxu0 %v1131
      %1413 = vmatprep.subr.mxu0 %v1140
      %1414 = vmatpush1.msra.mxu0 %v1139
      %1415 = vmatprep.subr.mxu0 %v1148
      %1416 = vmatpush1.msra.mxu0 %v1147
      %1417 = vmatprep.subr.mxu0 %v1156
      %1418 = vmatpush1.msra.mxu0 %v1155
      %1419 = vmatprep.subr.mxu0 %v1164
      %1420 = vmatpush1.msra.mxu0 %v1163
      %1421 = vmatprep.subr.mxu0 %v1172
      %1422 = vmatpush1.msra.mxu0 %v1171
      %1423 = vmatprep.subr.mxu0 %v1180
      %1424 = vmatpush1.msra.mxu0 %v1179
      %1425 = vmatprep.subr.mxu0 %v1188
      %1426 = vmatpush1.msra.mxu0 %v1187
      %1427 = vmatprep.subr.mxu0 %v1196
      %1428 = vmatpush1.msra.mxu0 %v1195
      %1429 = vmatprep.subr.mxu0 %v1204
      %1430 = vmatpush1.msra.mxu0 %v1203
      %1431 = vmatprep.subr.mxu0 %v1212
      %1432 = vmatpush1.msra.mxu0 %v1211
      %1433 = vmatprep.subr.mxu0 %v1220
      %1434 = vmatpush1.msra.mxu0 %v1219
      %1435 = vmatprep.subr.mxu0 %v1228
      %1436 = vmatpush1.msra.mxu0 %v1227
      %1437 = vmatprep.mubr.f32.mxu0 %v974
      %1438 = vmatmul.mubr.f32.gmra.mrb[0].mxu0 %v973
      %v1439 = vpop.f32.mrb[0].mxu0
      %v1440 = vadd.f32 0.0, %v1439
      %v1441 = vpop.f32.mrb[0].mxu0
      %v1442 = vadd.f32 0.0, %v1441
      %1443 = vdwg.mxu0
      %1444 = vmatprep.subr.mxu0 %v982
      %1445 = vmatpush1.msra.mxu0 %v981
      %1446 = vmatprep.subr.mxu0 %v990
      %1447 = vmatpush1.msra.mxu0 %v989
      %1448 = vmatprep.subr.mxu0 %v998
      %1449 = vmatpush1.msra.mxu0 %v997
      %1450 = vmatprep.subr.mxu0 %v1006
      %1451 = vmatpush1.msra.mxu0 %v1005
      %1452 = vmatprep.subr.mxu0 %v1014
      %1453 = vmatpush1.msra.mxu0 %v1013
      %1454 = vmatprep.subr.mxu0 %v1022
      %1455 = vmatpush1.msra.mxu0 %v1021
      %1456 = vmatprep.subr.mxu0 %v1030
      %1457 = vmatpush1.msra.mxu0 %v1029
      %1458 = vmatprep.subr.mxu0 %v1038
      %1459 = vmatpush1.msra.mxu0 %v1037
      %1460 = vmatprep.subr.mxu0 %v1046
      %1461 = vmatpush1.msra.mxu0 %v1045
      %1462 = vmatprep.subr.mxu0 %v1054
      %1463 = vmatpush1.msra.mxu0 %v1053
      %1464 = vmatprep.subr.mxu0 %v1062
      %1465 = vmatpush1.msra.mxu0 %v1061
      %1466 = vmatprep.subr.mxu0 %v1070
      %1467 = vmatpush1.msra.mxu0 %v1069
      %1468 = vmatprep.subr.mxu0 %v1078
      %1469 = vmatpush1.msra.mxu0 %v1077
      %1470 = vmatprep.subr.mxu0 %v1086
      %1471 = vmatpush1.msra.mxu0 %v1085
      %1472 = vmatprep.subr.mxu0 %v1094
      %1473 = vmatpush1.msra.mxu0 %v1093
      %1474 = vmatprep.subr.mxu0 %v1102
      %1475 = vmatpush1.msra.mxu0 %v1101
      %1476 = vmatprep.subr.mxu0 %v1110
      %1477 = vmatpush1.msra.mxu0 %v1109
      %1478 = vmatprep.subr.mxu0 %v1118
      %1479 = vmatpush1.msra.mxu0 %v1117
      %1480 = vmatprep.subr.mxu0 %v1126
      %1481 = vmatpush1.msra.mxu0 %v1125
      %1482 = vmatprep.subr.mxu0 %v1134
      %1483 = vmatpush1.msra.mxu0 %v1133
      %1484 = vmatprep.subr.mxu0 %v1142
      %1485 = vmatpush1.msra.mxu0 %v1141
      %1486 = vmatprep.subr.mxu0 %v1150
      %1487 = vmatpush1.msra.mxu0 %v1149
      %1488 = vmatprep.subr.mxu0 %v1158
      %1489 = vmatpush1.msra.mxu0 %v1157
      %1490 = vmatprep.subr.mxu0 %v1166
      %1491 = vmatpush1.msra.mxu0 %v1165
      %1492 = vmatprep.subr.mxu0 %v1174
      %1493 = vmatpush1.msra.mxu0 %v1173
      %1494 = vmatprep.subr.mxu0 %v1182
      %1495 = vmatpush1.msra.mxu0 %v1181
      %1496 = vmatprep.subr.mxu0 %v1190
      %1497 = vmatpush1.msra.mxu0 %v1189
      %1498 = vmatprep.subr.mxu0 %v1198
      %1499 = vmatpush1.msra.mxu0 %v1197
      %1500 = vmatprep.subr.mxu0 %v1206
      %1501 = vmatpush1.msra.mxu0 %v1205
      %1502 = vmatprep.subr.mxu0 %v1214
      %1503 = vmatpush1.msra.mxu0 %v1213
      %1504 = vmatprep.subr.mxu0 %v1222
      %1505 = vmatpush1.msra.mxu0 %v1221
      %1506 = vmatprep.subr.mxu0 %v1230
      %1507 = vmatpush1.msra.mxu0 %v1229
      %1508 = vmatprep.mubr.f32.mxu0 %v974
      %1509 = vmatmul.mubr.f32.gmra.mrb[0].mxu0 %v973
      %v1510 = vpop.f32.mrb[0].mxu0
      %v1511 = vadd.f32 0.0, %v1510
      %v1512 = vpop.f32.mrb[0].mxu0
      %v1513 = vadd.f32 0.0, %v1512
      %1514 = vdwg.mxu0
      %v1523 = vcombine.low %v1298, %v1300
      %v1524 = vcombine.low %v1369, %v1371
      %v1525 = vcombine.low %v1440, %v1442
      %v1526 = vcombine.low %v1511, %v1513
      %1531 = vst [vmem:[%s339] sm:$0xff] %v1523
      %1532 = vst [vmem:[%s339 + $0x8] sm:$0xff] %v1524
      %1533 = vst [vmem:[%s339 + $0x10] sm:$0xff] %v1525
      %1534 = vst [vmem:[%s339 + $0x18] sm:$0xff] %v1526
      %p1535 = scmp.lt.s32.totalorder %s19, 1
      %s1536 = scalar_select %p1535, %s19, 1
      %s1537 = smul.addr %s1536, 8
      %s1538 = smul.addr %s1537, 4
      %s1539 = scalar_lea.vmem %s8, %s1538
      // Predicated region
      $region53: #{decoder_block_forward.1} parent=51 // pred_check
        %p1540 = pneg %p220
      $region54: #{decoder_block_forward.1} parent=51 // pred_check_branch
        %1542 = sbr.rel (%p1540) target = $region56
      $region55: #{decoder_block_forward.1} parent=51 // pred_region
        _
      $region56: #{decoder_block_forward.1} parent=51 // pred_fallthru
        _
    $region52: #{decoder_block_forward.1} parent=5 // pred_fallthru
      _
    %p1543 = scmp.le.s32.totalorder 2, %s14
    // Predicated region
    $region57: #{decoder_block_forward.1} parent=5 // pred_check
      %p1544 = pneg %p1543
    $region58: #{decoder_block_forward.1} parent=5 // pred_check_branch
      %1546 = sbr.rel (%p1544) target = $region60
    $region59: #{decoder_block_forward.1} parent=5 // pred_region
      %s1547 = ssub.s32 %s14, 2
      // Predicated region
      $region61: #{decoder_block_forward.1} parent=59 // pred_check
        %p1548 = pneg %p226
      $region62: #{decoder_block_forward.1} parent=59 // pred_check_branch
        %1550 = sbr.rel (%p1548) target = $region64
      $region63: #{decoder_block_forward.1} parent=59 // pred_region
        %p1551 = scmp.lt.s32.totalorder %s20, 1
        %s1552 = scalar_select %p1551, %s20, 1
        %s1553 = smul.addr %s1552, 8
        %s1554 = smul.addr %s1553, 4
        %s1555 = scalar_lea.vmem %s8, %s1554
      $region64: #{decoder_block_forward.1} parent=59 // pred_fallthru
        _
    $region60: #{decoder_block_forward.1} parent=5 // pred_fallthru
      _
  $region6: #{decoder_block_forward.1} parent=0 // loop_footer
    %s18 = sadd.s32 1, %s14
  $region7: #{decoder_block_forward.1} parent=0 // loop_footer_branch
    %13 = sbr.rel target = $region3
  $region8: #{decoder_block_forward.1} parent=0 // loop_exit
    _

</llo_original>
